<compile_context>
chip_gen: v7x
topology: tpu7x:2x2x1
jax: 0.10.0
libtpu: 0.0.40
codegen_flags: <defaults>
</compile_context>

<pallas_src>
import jax
import jax.numpy as jnp
from jax import lax
from jax.experimental import pallas as pl
from jax.experimental.pallas import tpu as pltpu

EPS = 1e-5


# --------------------------------------------------------------------------
# helpers
# --------------------------------------------------------------------------
def _vmem_limit_bytes():
    """~75% of physical VMEM: ~96 MiB on v5e/v6e (128 MiB), ~48 MiB on v7x."""
    try:
        cap = pltpu.get_tpu_info().vmem_capacity_bytes
    except Exception:
        cap = 64 * 1024 * 1024
    return int(min(cap * 3 // 4, 100 * 1024 * 1024))


def _pick_row_tile(H, max_rows=64):
    """Largest divisor of H that is <= max_rows.
    TODO(synk): derive max_rows from the VMEM budget (W*C, dtype, x2 buffers)."""
    th = 1
    for d in range(1, H + 1):
        if H % d == 0 and d <= max_rows:
            th = d
    return th


def _build_halo(a, th):
    """(N,H,W,C) -> (N*nH, th+2, W, C): overlapping row slabs, zero-padded in H.
    TODO(synk): replace this HBM copy with an overlapping-window index_map or a
    manual make_async_copy of th+2 rows."""
    N, H, W, C = a.shape
    nH = H // th
    ap = jnp.pad(a, ((0, 0), (1, 1), (0, 0), (0, 0)))
    slabs = [ap[:, i * th:i * th + th + 2] for i in range(nH)]
    return jnp.stack(slabs, axis=1).reshape(N * nH, th + 2, W, C)


def _finalize_bn(stats, gamma, beta, m):
    """Fold per-image partial (sum, sumsq) into per-channel scale/shift."""
    s = jnp.sum(stats[:, 0, :], axis=0)
    ss = jnp.sum(stats[:, 1, :], axis=0)
    mean = s / m
    # TODO(synk): E[x^2]-E[x]^2 is cancellation-prone for |mean| >> std.
    var = ss / m - mean * mean
    scale = gamma.reshape(-1) * lax.rsqrt(var + EPS)
    shift = beta.reshape(-1) - mean * scale
    return scale.reshape(1, -1), shift.reshape(1, -1)


def _conv3x3_rows(xh, w):
    """xh: (TH+2, W, C) zero-haloed activations (matmul dtype, e.g. bf16).
    w: (9*Cin, Cout).  One im2col MXU matmul with f32 accumulation.
    H taps are leading-axis slices (free); W taps are sublane shifts w/ zero
    border (XLU)."""
    TH2, W, C = xh.shape
    TH = TH2 - 2
    zcol = jnp.zeros((TH, 1, C), xh.dtype)
    taps = []
    for dy in (-1, 0, 1):                    # kh (HWIO row-major weight order)
        rows = xh[dy + 1: dy + 1 + TH]       # (TH, W, C)
        for dx in (-1, 0, 1):                # kw
            if dx == 0:
                t = rows
            elif dx > 0:
                t = jnp.concatenate([rows[:, dx:, :], zcol], axis=1)
            else:
                t = jnp.concatenate([zcol, rows[:, :dx, :]], axis=1)
            taps.append(t.reshape(TH * W, C))
    # TODO(synk): for C not a multiple of 128, each tap lands at a misaligned
    # lane offset (XLU relayouts); pad Cin (and matching weight rows) to 128.
    patches = jnp.concatenate(taps, axis=-1)           # (TH*W, 9*C)
    return jnp.dot(patches, w, preferred_element_type=jnp.float32)


# --------------------------------------------------------------------------
# kernels
# --------------------------------------------------------------------------
def _conv1_stats_kernel(xh_ref, w_ref, y_ref, stats_ref, acc_ref):
    h = pl.program_id(1)
    TH2, W, C = xh_ref.shape[1], xh_ref.shape[2], xh_ref.shape[3]
    TH = TH2 - 2

    xh = xh_ref[...].reshape(TH2, W, C)                 # bf16 haloed slab
    y = _conv3x3_rows(xh, w_ref[...])                   # (TH*W, C) f32
    y_ref[...] = y.reshape(1, TH, W, C)

    s = jnp.sum(y, axis=0, keepdims=True)               # (1, C) f32
    ss = jnp.sum(y * y, axis=0, keepdims=True)
    part = jnp.concatenate([s, ss], axis=0)             # (2, C)

    @pl.when(h == 0)
    def _():
        acc_ref[...] = jnp.zeros_like(acc_ref)

    acc_ref[...] += part

    @pl.when(h == pl.num_programs(1) - 1)
    def _():
        stats_ref[...] = acc_ref[...].reshape(1, 2, C)


def _bn1_swish_conv2_stats_kernel(yh_ref, sc_ref, sh_ref, w_ref,
                                  z_ref, stats_ref, acc_ref):
    h = pl.program_id(1)
    nh = pl.num_programs(1)
    TH2, W, C = yh_ref.shape[1], yh_ref.shape[2], yh_ref.shape[3]
    TH = TH2 - 2

    yh = yh_ref[...].reshape(TH2, W, C)                  # f32 haloed conv1 out
    a = yh * sc_ref[...].reshape(1, 1, C) + sh_ref[...].reshape(1, 1, C)
    a = a * jax.nn.sigmoid(a)                            # swish (EUP), f32
    # conv2's zero padding lives in the *post-swish activation* domain: zero
    # the halo rows that fall outside the image (top of first / bottom of last
    # row block).  Interior halo rows hold the neighbouring block's rows.
    r = lax.broadcasted_iota(jnp.int32, (TH2, 1, 1), 0)
    valid = jnp.logical_and(jnp.logical_or(h != 0, r > 0),
                            jnp.logical_or(h != nh - 1, r < TH2 - 1))
    a = jnp.where(valid, a, 0.0)

    z = _conv3x3_rows(a.astype(w_ref.dtype), w_ref[...])  # bf16 matmul, f32 acc
    z_ref[...] = z.reshape(1, TH, W, C)

    s = jnp.sum(z, axis=0, keepdims=True)
    ss = jnp.sum(z * z, axis=0, keepdims=True)
    part = jnp.concatenate([s, ss], axis=0)

    @pl.when(h == 0)
    def _():
        acc_ref[...] = jnp.zeros_like(acc_ref)

    acc_ref[...] += part

    @pl.when(h == nh - 1)
    def _():
        stats_ref[...] = acc_ref[...].reshape(1, 2, C)


def _bn2_residual_kernel(z_ref, x_ref, sc_ref, sh_ref, out_ref):
    # Fully lane-dense: last dim is W*C, per-channel scale/shift pre-tiled.
    out_ref[...] = (z_ref[...] * sc_ref[...] + sh_ref[...]) * 0.1 + x_ref[...]


# --------------------------------------------------------------------------
# wrapper
# --------------------------------------------------------------------------
def residual_block(x, w1, b1, g1, be1, w2, b2, g2, be2, *,
                   th=None, matmul_dtype=jnp.bfloat16):
    """x: (N,H,W,C) f32; conv weights HWIO (3,3,C,C); per-channel params (1,C).

    Conv biases b1/b2 are accepted for API parity with the PyTorch module but
    unused: a per-channel bias immediately before training-mode BatchNorm
    cancels exactly (it only shifts the batch mean)."""
    del b1, b2
    N, H, W, C = x.shape
    M = N * H * W
    if th is None:
        th = _pick_row_tile(H)
    assert H % th == 0, "row tile must divide H"   # TODO(synk): ragged tiles
    nH = H // th
    vlim = _vmem_limit_bytes()

    # HWIO (3,3,Cin,Cout) -> (9*Cin, Cout), row-major over (kh, kw, cin);
    # matches the in-kernel im2col tap order.  bf16 MXU operands.
    w1r = w1.reshape(9 * C, C).astype(matmul_dtype)
    w2r = w2.reshape(9 * C, C).astype(matmul_dtype)

    dsem = pltpu.CompilerParams(dimension_semantics=("parallel", "arbitrary"),
                                vmem_limit_bytes=vlim)

    # ---------------- pass A: conv1 + per-image partial BN1 stats ------------
    xh = _build_halo(x.astype(matmul_dtype), th)        # (N*nH, th+2, W, C)
    y1, st1 = pl.pallas_call(
        _conv1_stats_kernel,
        out_shape=(jax.ShapeDtypeStruct((N, H, W, C), jnp.float32),
                   jax.ShapeDtypeStruct((N, 2, C), jnp.float32)),
        grid_spec=pltpu.PrefetchScalarGridSpec(
            num_scalar_prefetch=0,
            grid=(N, nH),
            in_specs=[pl.BlockSpec((1, th + 2, W, C),
                                   lambda n, h: (n * nH + h, 0, 0, 0)),
                      pl.BlockSpec((9 * C, C), lambda n, h: (0, 0))],
            out_specs=[pl.BlockSpec((1, th, W, C), lambda n, h: (n, h, 0, 0)),
                       pl.BlockSpec((1, 2, C), lambda n, h: (n, 0, 0))],
            scratch_shapes=[pltpu.VMEM((2, C), jnp.float32)]),
        compiler_params=dsem,
    )(xh, w1r)
    scale1, shift1 = _finalize_bn(st1, g1, be1, M)

    # ------ pass B: BN1-apply + swish + conv2 + per-image partial BN2 stats --
    yh = _build_halo(y1, th)                             # f32 haloed conv1 out
    z, st2 = pl.pallas_call(
        _bn1_swish_conv2_stats_kernel,
        out_shape=(jax.ShapeDtypeStruct((N, H, W, C), jnp.float32),
                   jax.ShapeDtypeStruct((N, 2, C), jnp.float32)),
        grid_spec=pltpu.PrefetchScalarGridSpec(
            num_scalar_prefetch=0,
            grid=(N, nH),
            in_specs=[pl.BlockSpec((1, th + 2, W, C),
                                   lambda n, h: (n * nH + h, 0, 0, 0)),
                      pl.BlockSpec((1, C), lambda n, h: (0, 0)),
                      pl.BlockSpec((1, C), lambda n, h: (0, 0)),
                      pl.BlockSpec((9 * C, C), lambda n, h: (0, 0))],
            out_specs=[pl.BlockSpec((1, th, W, C), lambda n, h: (n, h, 0, 0)),
                       pl.BlockSpec((1, 2, C), lambda n, h: (n, 0, 0))],
            scratch_shapes=[pltpu.VMEM((2, C), jnp.float32)]),
        compiler_params=dsem,
    )(yh, scale1, shift1, w2r)
    scale2, shift2 = _finalize_bn(st2, g2, be2, M)

    # ---------------- pass C: lane-dense BN2-apply + residual ----------------
    WC = W * C
    NH = N * H
    tr = 8 if NH % 8 == 0 else NH
    out_flat = pl.pallas_call(
        _bn2_residual_kernel,
        out_shape=jax.ShapeDtypeStruct((NH, WC), jnp.float32),
        grid_spec=pltpu.PrefetchScalarGridSpec(
            num_scalar_prefetch=0,
            grid=(NH // tr,),
            in_specs=[pl.BlockSpec((tr, WC), lambda i: (i, 0)),
                      pl.BlockSpec((tr, WC), lambda i: (i, 0)),
                      pl.BlockSpec((1, WC), lambda i: (0, 0)),
                      pl.BlockSpec((1, WC), lambda i: (0, 0))],
            out_specs=pl.BlockSpec((tr, WC), lambda i: (i, 0))),
        compiler_params=pltpu.CompilerParams(
            dimension_semantics=("parallel",), vmem_limit_bytes=vlim),
    )(z.reshape(NH, WC), x.reshape(NH, WC),
      jnp.tile(scale2, (1, W)), jnp.tile(shift2, (1, W)))
    return out_flat.reshape(N, H, W, C)


# --------------------------------------------------------------------------
# pure-JAX reference (same NHWC/HWIO layout; same bf16 matmul-operand rounding)
# --------------------------------------------------------------------------
def reference_forward(x, w1, b1, g1, be1, w2, b2, g2, be2,
                      matmul_dtype=jnp.bfloat16):
    def conv(a, w, b):
        y = lax.conv_general_dilated(
            a.astype(matmul_dtype), w.astype(matmul_dtype),
            window_strides=(1, 1), padding=((1, 1), (1, 1)),
            dimension_numbers=("NHWC", "HWIO", "NHWC"),
            preferred_element_type=jnp.float32)
        return y + b.reshape(1, 1, 1, -1)

    def bn(a, g, be):
        m = jnp.mean(a, axis=(0, 1, 2), keepdims=True)
        v = jnp.mean((a - m) ** 2, axis=(0, 1, 2), keepdims=True)
        return (a - m) * lax.rsqrt(v + EPS) * g.reshape(1, 1, 1, -1) \
            + be.reshape(1, 1, 1, -1)

    y = bn(conv(x, w1, b1), g1, be1)
    y = y * jax.nn.sigmoid(y)
    return bn(conv(y, w2, b2), g2, be2) * 0.1 + x


if __name__ == "__main__":
    # NHWC; in_channels == n so the residual add is valid.  W*C = 128 so the
    # final pass is exactly lane-dense; H=16 with th=8 exercises the 2-step
    # BN-stats accumulation grid.
    N, H, W, C = 2, 16, 16, 8

    key = jax.random.PRNGKey(0)
    kx, kw1, kb1, kw2, kb2 = jax.random.split(key, 5)

    x = jax.random.normal(kx, (N, H, W, C), jnp.float32)
    w1 = jax.random.normal(kw1, (3, 3, C, C), jnp.float32) * 0.1
    b1 = jax.random.normal(kb1, (1, C), jnp.float32) * 0.1
    w2 = jax.random.normal(kw2, (3, 3, C, C), jnp.float32) * 0.1
    b2 = jax.random.normal(kb2, (1, C), jnp.float32) * 0.1
    g1 = jnp.ones((1, C), jnp.float32)      # BatchNorm default gamma=1
    be1 = jnp.zeros((1, C), jnp.float32)    # BatchNorm default beta=0
    g2 = jnp.ones((1, C), jnp.float32)
    be2 = jnp.zeros((1, C), jnp.float32)

    fn = jax.jit(lambda *a: residual_block(*a, th=8))
    out = jax.block_until_ready(fn(x, w1, b1, g1, be1, w2, b2, g2, be2))

    ref = reference_forward(x, w1, b1, g1, be1, w2, b2, g2, be2)
    assert out.shape == (N, H, W, C)
    err = float(jnp.max(jnp.abs(out - ref)))
    # bf16 MXU operands (f32 accumulation) on both sides; BN + *0.1 keep the
    # remaining rounding-order differences well inside this tolerance.
    assert jnp.allclose(out, ref, rtol=1e-2, atol=1e-2), f"max abs err {err}"

    print("KERNEL_OK")
</pallas_src>

<mosaic_0001>
module attributes {stable_mosaic.version = 11 : i64} {
  func.func @_conv1_stats_kernel(%arg0: i32, %arg1: i32, %arg2: memref<1x10x16x8xbf16, #tpu.memory_space<vmem>>, %arg3: memref<72x8xbf16, #tpu.memory_space<vmem>>, %arg4: memref<1x8x16x8xf32, #tpu.memory_space<vmem>>, %arg5: memref<1x2x8xf32, #tpu.memory_space<vmem>>, %arg6: memref<2x8xf32, #tpu.memory_space<vmem>>) attributes {dimension_semantics = [#tpu.dimension_semantics<parallel>, #tpu.dimension_semantics<arbitrary>], iteration_bounds = array<i64: 2, 2>, scalar_prefetch = 0 : i64, scratch_operands = 1 : i64, tpu.core_type = #tpu.core_type<tc>, window_params = [{transform_indices = @transform_0, window_bounds = array<i64: 1, 10, 16, 8>}, {pipeline_mode = #tpu.pipeline_mode<synchronous>, transform_indices = @transform_1, window_bounds = array<i64: 72, 8>}, {transform_indices = @transform_2, window_bounds = array<i64: 1, 8, 16, 8>}, {transform_indices = @transform_3, window_bounds = array<i64: 1, 2, 8>}]} {
    %c0 = arith.constant 0 : index
    %c0_0 = arith.constant 0 : index
    %c0_1 = arith.constant 0 : index
    %c0_2 = arith.constant 0 : index
    %0 = vector.load %arg2[%c0, %c0_0, %c0_1, %c0_2] : memref<1x10x16x8xbf16, #tpu.memory_space<vmem>>, vector<1x10x16x8xbf16>
    %1 = vector.shape_cast %0 : vector<1x10x16x8xbf16> to vector<10x16x8xbf16>
    %c0_3 = arith.constant 0 : index
    %c0_4 = arith.constant 0 : index
    %2 = vector.load %arg3[%c0_3, %c0_4] : memref<72x8xbf16, #tpu.memory_space<vmem>>, vector<72x8xbf16>
    %cst = arith.constant 0.000000e+00 : bf16
    %3 = vector.broadcast %cst : bf16 to vector<8x1x8xbf16>
    %4 = vector.extract_strided_slice %1 {offsets = [0, 0, 0], sizes = [8, 16, 8], strides = [1, 1, 1]} : vector<10x16x8xbf16> to vector<8x16x8xbf16>
    %5 = vector.extract_strided_slice %4 {offsets = [0, 0, 0], sizes = [8, 15, 8], strides = [1, 1, 1]} : vector<8x16x8xbf16> to vector<8x15x8xbf16>
    %6 = tpu.concatenate %3, %5 in 1 : vector<8x1x8xbf16>, vector<8x15x8xbf16> -> vector<8x16x8xbf16>
    %7 = vector.shape_cast %6 : vector<8x16x8xbf16> to vector<128x8xbf16>
    %8 = vector.shape_cast %4 : vector<8x16x8xbf16> to vector<128x8xbf16>
    %9 = vector.extract_strided_slice %4 {offsets = [0, 1, 0], sizes = [8, 15, 8], strides = [1, 1, 1]} : vector<8x16x8xbf16> to vector<8x15x8xbf16>
    %10 = tpu.concatenate %9, %3 in 1 : vector<8x15x8xbf16>, vector<8x1x8xbf16> -> vector<8x16x8xbf16>
    %11 = vector.shape_cast %10 : vector<8x16x8xbf16> to vector<128x8xbf16>
    %12 = vector.extract_strided_slice %1 {offsets = [1, 0, 0], sizes = [8, 16, 8], strides = [1, 1, 1]} : vector<10x16x8xbf16> to vector<8x16x8xbf16>
    %13 = vector.extract_strided_slice %12 {offsets = [0, 0, 0], sizes = [8, 15, 8], strides = [1, 1, 1]} : vector<8x16x8xbf16> to vector<8x15x8xbf16>
    %14 = tpu.concatenate %3, %13 in 1 : vector<8x1x8xbf16>, vector<8x15x8xbf16> -> vector<8x16x8xbf16>
    %15 = vector.shape_cast %14 : vector<8x16x8xbf16> to vector<128x8xbf16>
    %16 = vector.shape_cast %12 : vector<8x16x8xbf16> to vector<128x8xbf16>
    %17 = vector.extract_strided_slice %12 {offsets = [0, 1, 0], sizes = [8, 15, 8], strides = [1, 1, 1]} : vector<8x16x8xbf16> to vector<8x15x8xbf16>
    %18 = tpu.concatenate %17, %3 in 1 : vector<8x15x8xbf16>, vector<8x1x8xbf16> -> vector<8x16x8xbf16>
    %19 = vector.shape_cast %18 : vector<8x16x8xbf16> to vector<128x8xbf16>
    %20 = vector.extract_strided_slice %1 {offsets = [2, 0, 0], sizes = [8, 16, 8], strides = [1, 1, 1]} : vector<10x16x8xbf16> to vector<8x16x8xbf16>
    %21 = vector.extract_strided_slice %20 {offsets = [0, 0, 0], sizes = [8, 15, 8], strides = [1, 1, 1]} : vector<8x16x8xbf16> to vector<8x15x8xbf16>
    %22 = tpu.concatenate %3, %21 in 1 : vector<8x1x8xbf16>, vector<8x15x8xbf16> -> vector<8x16x8xbf16>
    %23 = vector.shape_cast %22 : vector<8x16x8xbf16> to vector<128x8xbf16>
    %24 = vector.shape_cast %20 : vector<8x16x8xbf16> to vector<128x8xbf16>
    %25 = vector.extract_strided_slice %20 {offsets = [0, 1, 0], sizes = [8, 15, 8], strides = [1, 1, 1]} : vector<8x16x8xbf16> to vector<8x15x8xbf16>
    %26 = tpu.concatenate %25, %3 in 1 : vector<8x15x8xbf16>, vector<8x1x8xbf16> -> vector<8x16x8xbf16>
    %27 = vector.shape_cast %26 : vector<8x16x8xbf16> to vector<128x8xbf16>
    %28 = tpu.concatenate %7, %8, %11, %15, %16, %19, %23, %24, %27 in 1 : vector<128x8xbf16>, vector<128x8xbf16>, vector<128x8xbf16>, vector<128x8xbf16>, vector<128x8xbf16>, vector<128x8xbf16>, vector<128x8xbf16>, vector<128x8xbf16>, vector<128x8xbf16> -> vector<128x72xbf16>
    %cst_5 = arith.constant dense<0.000000e+00> : vector<128x8xf32>
    %29 = tpu.matmul %28, %2, %cst_5 {dimension_numbers = #tpu.dot_dimension_numbers<[1], [0], [0], [1], [0, 0, 1, 1], [], []>} : vector<128x72xbf16>, vector<72x8xbf16>, vector<128x8xf32> -> vector<128x8xf32>
    %30 = vector.shape_cast %29 : vector<128x8xf32> to vector<1x8x16x8xf32>
    %c0_6 = arith.constant 0 : index
    %c0_7 = arith.constant 0 : index
    %c0_8 = arith.constant 0 : index
    %c0_9 = arith.constant 0 : index
    %31 = vector.load %arg4[%c0_6, %c0_7, %c0_8, %c0_9] : memref<1x8x16x8xf32, #tpu.memory_space<vmem>>, vector<1x8x16x8xf32>
    tpu.vector_store %arg4[%c0_6, %c0_7, %c0_8, %c0_9], %30 {strides = array<i32>} : memref<1x8x16x8xf32, #tpu.memory_space<vmem>>, vector<1x8x16x8xf32>,
    %cst_10 = arith.constant dense<0.000000e+00> : vector<8xf32>
    %32 = vector.multi_reduction <add>, %29, %cst_10 [0] : vector<128x8xf32> to vector<8xf32>
    %33 = vector.shape_cast %32 : vector<8xf32> to vector<1x8xf32>
    %34 = arith.mulf %29, %29 : vector<128x8xf32>
    %cst_11 = arith.constant dense<0.000000e+00> : vector<8xf32>
    %35 = vector.multi_reduction <add>, %34, %cst_11 [0] : vector<128x8xf32> to vector<8xf32>
    %36 = vector.shape_cast %35 : vector<8xf32> to vector<1x8xf32>
    %37 = tpu.concatenate %33, %36 in 0 : vector<1x8xf32>, vector<1x8xf32> -> vector<2x8xf32>
    %c0_i32 = arith.constant 0 : i32
    %38 = arith.cmpi eq, %arg1, %c0_i32 : i32
    %39 = arith.extui %38 : i1 to i32
    %c0_i32_12 = arith.constant 0 : i32
    %40 = arith.cmpi ne, %39, %c0_i32_12 : i32
    scf.if %40 {
      %cst_18 = arith.constant 0.000000e+00 : f32
      %47 = vector.broadcast %cst_18 : f32 to vector<2x8xf32>
      %c0_19 = arith.constant 0 : index
      %c0_20 = arith.constant 0 : index
      %48 = vector.load %arg6[%c0_19, %c0_20] : memref<2x8xf32, #tpu.memory_space<vmem>>, vector<2x8xf32>
      tpu.vector_store %arg6[%c0_19, %c0_20], %47 {strides = array<i32>} : memref<2x8xf32, #tpu.memory_space<vmem>>, vector<2x8xf32>,
    } else {
    }
    %c0_13 = arith.constant 0 : index
    %c0_14 = arith.constant 0 : index
    %41 = vector.load %arg6[%c0_13, %c0_14] : memref<2x8xf32, #tpu.memory_space<vmem>>, vector<2x8xf32>
    %42 = arith.addf %41, %37 : vector<2x8xf32>
    %c0_15 = arith.constant 0 : index
    %c0_16 = arith.constant 0 : index
    %43 = vector.load %arg6[%c0_15, %c0_16] : memref<2x8xf32, #tpu.memory_space<vmem>>, vector<2x8xf32>
    tpu.vector_store %arg6[%c0_15, %c0_16], %42 {strides = array<i32>} : memref<2x8xf32, #tpu.memory_space<vmem>>, vector<2x8xf32>,
    %c1_i32 = arith.constant 1 : i32
    %44 = arith.cmpi eq, %arg1, %c1_i32 : i32
    %45 = arith.extui %44 : i1 to i32
    %c0_i32_17 = arith.constant 0 : i32
    %46 = arith.cmpi ne, %45, %c0_i32_17 : i32
    scf.if %46 {
      %c0_18 = arith.constant 0 : index
      %c0_19 = arith.constant 0 : index
      %47 = vector.load %arg6[%c0_18, %c0_19] : memref<2x8xf32, #tpu.memory_space<vmem>>, vector<2x8xf32>
      %48 = vector.shape_cast %47 : vector<2x8xf32> to vector<1x2x8xf32>
      %c0_20 = arith.constant 0 : index
      %c0_21 = arith.constant 0 : index
      %c0_22 = arith.constant 0 : index
      %49 = vector.load %arg5[%c0_20, %c0_21, %c0_22] : memref<1x2x8xf32, #tpu.memory_space<vmem>>, vector<1x2x8xf32>
      tpu.vector_store %arg5[%c0_20, %c0_21, %c0_22], %48 {strides = array<i32>} : memref<1x2x8xf32, #tpu.memory_space<vmem>>, vector<1x2x8xf32>,
    } else {
    }
    return
  }
  func.func @transform_0(%arg0: i32, %arg1: i32) -> (i32, i32, i32, i32) {
    %c2_i32 = arith.constant 2 : i32
    %0 = arith.muli %arg0, %c2_i32 : i32
    %1 = arith.addi %0, %arg1 : i32
    %c0_i32 = arith.constant 0 : i32
    %c0_i32_0 = arith.constant 0 : i32
    %c0_i32_1 = arith.constant 0 : i32
    %c0_i32_2 = arith.constant 0 : i32
    return %1, %c0_i32, %c0_i32_0, %c0_i32_1 : i32, i32, i32, i32
  }
  func.func @transform_1(%arg0: i32, %arg1: i32) -> (i32, i32) {
    %c0_i32 = arith.constant 0 : i32
    %c0_i32_0 = arith.constant 0 : i32
    %c0_i32_1 = arith.constant 0 : i32
    return %c0_i32, %c0_i32_0 : i32, i32
  }
  func.func @transform_2(%arg0: i32, %arg1: i32) -> (i32, i32, i32, i32) {
    %c0_i32 = arith.constant 0 : i32
    %c0_i32_0 = arith.constant 0 : i32
    %c0_i32_1 = arith.constant 0 : i32
    return %arg0, %arg1, %c0_i32, %c0_i32_0 : i32, i32, i32, i32
  }
  func.func @transform_3(%arg0: i32, %arg1: i32) -> (i32, i32, i32) {
    %c0_i32 = arith.constant 0 : i32
    %c0_i32_0 = arith.constant 0 : i32
    %c0_i32_1 = arith.constant 0 : i32
    return %arg0, %c0_i32, %c0_i32_0 : i32, i32, i32
  }
}

module attributes {stable_mosaic.version = 11 : i64} {
  func.func @_bn1_swish_conv2_stats_kernel(%arg0: i32, %arg1: i32, %arg2: memref<1x10x16x8xf32, #tpu.memory_space<vmem>>, %arg3: memref<1x8xf32, #tpu.memory_space<vmem>>, %arg4: memref<1x8xf32, #tpu.memory_space<vmem>>, %arg5: memref<72x8xbf16, #tpu.memory_space<vmem>>, %arg6: memref<1x8x16x8xf32, #tpu.memory_space<vmem>>, %arg7: memref<1x2x8xf32, #tpu.memory_space<vmem>>, %arg8: memref<2x8xf32, #tpu.memory_space<vmem>>) attributes {dimension_semantics = [#tpu.dimension_semantics<parallel>, #tpu.dimension_semantics<arbitrary>], iteration_bounds = array<i64: 2, 2>, scalar_prefetch = 0 : i64, scratch_operands = 1 : i64, tpu.core_type = #tpu.core_type<tc>, window_params = [{transform_indices = @transform_0, window_bounds = array<i64: 1, 10, 16, 8>}, {pipeline_mode = #tpu.pipeline_mode<synchronous>, transform_indices = @transform_1, window_bounds = array<i64: 1, 8>}, {pipeline_mode = #tpu.pipeline_mode<synchronous>, transform_indices = @transform_2, window_bounds = array<i64: 1, 8>}, {pipeline_mode = #tpu.pipeline_mode<synchronous>, transform_indices = @transform_3, window_bounds = array<i64: 72, 8>}, {transform_indices = @transform_4, window_bounds = array<i64: 1, 8, 16, 8>}, {transform_indices = @transform_5, window_bounds = array<i64: 1, 2, 8>}]} {
    %c0 = arith.constant 0 : index
    %c0_0 = arith.constant 0 : index
    %c0_1 = arith.constant 0 : index
    %c0_2 = arith.constant 0 : index
    %0 = vector.load %arg2[%c0, %c0_0, %c0_1, %c0_2] : memref<1x10x16x8xf32, #tpu.memory_space<vmem>>, vector<1x10x16x8xf32>
    %1 = vector.shape_cast %0 : vector<1x10x16x8xf32> to vector<10x16x8xf32>
    %c0_3 = arith.constant 0 : index
    %c0_4 = arith.constant 0 : index
    %2 = vector.load %arg3[%c0_3, %c0_4] : memref<1x8xf32, #tpu.memory_space<vmem>>, vector<1x8xf32>
    %3 = vector.shape_cast %2 : vector<1x8xf32> to vector<1x1x8xf32>
    %4 = vector.broadcast %3 : vector<1x1x8xf32> to vector<10x16x8xf32>
    %5 = arith.mulf %1, %4 : vector<10x16x8xf32>
    %c0_5 = arith.constant 0 : index
    %c0_6 = arith.constant 0 : index
    %6 = vector.load %arg4[%c0_5, %c0_6] : memref<1x8xf32, #tpu.memory_space<vmem>>, vector<1x8xf32>
    %7 = vector.shape_cast %6 : vector<1x8xf32> to vector<1x1x8xf32>
    %8 = vector.broadcast %7 : vector<1x1x8xf32> to vector<10x16x8xf32>
    %9 = arith.addf %5, %8 : vector<10x16x8xf32>
    %10 = arith.negf %9 : vector<10x16x8xf32>
    %11 = math.exp %10 : vector<10x16x8xf32>
    %cst = arith.constant 1.000000e+00 : f32
    %12 = vector.broadcast %cst : f32 to vector<10x16x8xf32>
    %13 = arith.addf %12, %11 : vector<10x16x8xf32>
    %14 = arith.divf %12, %13 : vector<10x16x8xf32>
    %15 = arith.mulf %9, %14 : vector<10x16x8xf32>
    %16 = tpu.iota {dimensions = array<i32: 0>} : vector<10x1x1xi32>
    %c0_i32 = arith.constant 0 : i32
    %17 = arith.cmpi ne, %arg1, %c0_i32 : i32
    %c0_i32_7 = arith.constant 0 : i32
    %18 = vector.broadcast %c0_i32_7 : i32 to vector<10x1x1xi32>
    %19 = arith.cmpi sgt, %16, %18 : vector<10x1x1xi32>
    %20 = vector.broadcast %17 : i1 to vector<10x1x1xi1>
    %21 = arith.ori %20, %19 : vector<10x1x1xi1>
    %c1_i32 = arith.constant 1 : i32
    %22 = arith.cmpi ne, %arg1, %c1_i32 : i32
    %c9_i32 = arith.constant 9 : i32
    %23 = vector.broadcast %c9_i32 : i32 to vector<10x1x1xi32>
    %24 = arith.cmpi slt, %16, %23 : vector<10x1x1xi32>
    %25 = vector.broadcast %22 : i1 to vector<10x1x1xi1>
    %26 = arith.ori %25, %24 : vector<10x1x1xi1>
    %27 = arith.andi %21, %26 : vector<10x1x1xi1>
    %cst_8 = arith.constant 0.000000e+00 : f32
    %28 = vector.shape_cast %27 : vector<10x1x1xi1> to vector<10x1x1xi1>
    %29 = vector.broadcast %28 : vector<10x1x1xi1> to vector<10x16x8xi1>
    %30 = vector.broadcast %cst_8 : f32 to vector<10x16x8xf32>
    %31 = arith.select %29, %15, %30 : vector<10x16x8xi1>, vector<10x16x8xf32>
    %32 = arith.truncf %31 : vector<10x16x8xf32> to vector<10x16x8xbf16>
    %c0_9 = arith.constant 0 : index
    %c0_10 = arith.constant 0 : index
    %33 = vector.load %arg5[%c0_9, %c0_10] : memref<72x8xbf16, #tpu.memory_space<vmem>>, vector<72x8xbf16>
    %cst_11 = arith.constant 0.000000e+00 : bf16
    %34 = vector.broadcast %cst_11 : bf16 to vector<8x1x8xbf16>
    %35 = vector.extract_strided_slice %32 {offsets = [0, 0, 0], sizes = [8, 16, 8], strides = [1, 1, 1]} : vector<10x16x8xbf16> to vector<8x16x8xbf16>
    %36 = vector.extract_strided_slice %35 {offsets = [0, 0, 0], sizes = [8, 15, 8], strides = [1, 1, 1]} : vector<8x16x8xbf16> to vector<8x15x8xbf16>
    %37 = tpu.concatenate %34, %36 in 1 : vector<8x1x8xbf16>, vector<8x15x8xbf16> -> vector<8x16x8xbf16>
    %38 = vector.shape_cast %37 : vector<8x16x8xbf16> to vector<128x8xbf16>
    %39 = vector.shape_cast %35 : vector<8x16x8xbf16> to vector<128x8xbf16>
    %40 = vector.extract_strided_slice %35 {offsets = [0, 1, 0], sizes = [8, 15, 8], strides = [1, 1, 1]} : vector<8x16x8xbf16> to vector<8x15x8xbf16>
    %41 = tpu.concatenate %40, %34 in 1 : vector<8x15x8xbf16>, vector<8x1x8xbf16> -> vector<8x16x8xbf16>
    %42 = vector.shape_cast %41 : vector<8x16x8xbf16> to vector<128x8xbf16>
    %43 = vector.extract_strided_slice %32 {offsets = [1, 0, 0], sizes = [8, 16, 8], strides = [1, 1, 1]} : vector<10x16x8xbf16> to vector<8x16x8xbf16>
    %44 = vector.extract_strided_slice %43 {offsets = [0, 0, 0], sizes = [8, 15, 8], strides = [1, 1, 1]} : vector<8x16x8xbf16> to vector<8x15x8xbf16>
    %45 = tpu.concatenate %34, %44 in 1 : vector<8x1x8xbf16>, vector<8x15x8xbf16> -> vector<8x16x8xbf16>
    %46 = vector.shape_cast %45 : vector<8x16x8xbf16> to vector<128x8xbf16>
    %47 = vector.shape_cast %43 : vector<8x16x8xbf16> to vector<128x8xbf16>
    %48 = vector.extract_strided_slice %43 {offsets = [0, 1, 0], sizes = [8, 15, 8], strides = [1, 1, 1]} : vector<8x16x8xbf16> to vector<8x15x8xbf16>
    %49 = tpu.concatenate %48, %34 in 1 : vector<8x15x8xbf16>, vector<8x1x8xbf16> -> vector<8x16x8xbf16>
    %50 = vector.shape_cast %49 : vector<8x16x8xbf16> to vector<128x8xbf16>
    %51 = vector.extract_strided_slice %32 {offsets = [2, 0, 0], sizes = [8, 16, 8], strides = [1, 1, 1]} : vector<10x16x8xbf16> to vector<8x16x8xbf16>
    %52 = vector.extract_strided_slice %51 {offsets = [0, 0, 0], sizes = [8, 15, 8], strides = [1, 1, 1]} : vector<8x16x8xbf16> to vector<8x15x8xbf16>
    %53 = tpu.concatenate %34, %52 in 1 : vector<8x1x8xbf16>, vector<8x15x8xbf16> -> vector<8x16x8xbf16>
    %54 = vector.shape_cast %53 : vector<8x16x8xbf16> to vector<128x8xbf16>
    %55 = vector.shape_cast %51 : vector<8x16x8xbf16> to vector<128x8xbf16>
    %56 = vector.extract_strided_slice %51 {offsets = [0, 1, 0], sizes = [8, 15, 8], strides = [1, 1, 1]} : vector<8x16x8xbf16> to vector<8x15x8xbf16>
    %57 = tpu.concatenate %56, %34 in 1 : vector<8x15x8xbf16>, vector<8x1x8xbf16> -> vector<8x16x8xbf16>
    %58 = vector.shape_cast %57 : vector<8x16x8xbf16> to vector<128x8xbf16>
    %59 = tpu.concatenate %38, %39, %42, %46, %47, %50, %54, %55, %58 in 1 : vector<128x8xbf16>, vector<128x8xbf16>, vector<128x8xbf16>, vector<128x8xbf16>, vector<128x8xbf16>, vector<128x8xbf16>, vector<128x8xbf16>, vector<128x8xbf16>, vector<128x8xbf16> -> vector<128x72xbf16>
    %cst_12 = arith.constant dense<0.000000e+00> : vector<128x8xf32>
    %60 = tpu.matmul %59, %33, %cst_12 {dimension_numbers = #tpu.dot_dimension_numbers<[1], [0], [0], [1], [0, 0, 1, 1], [], []>} : vector<128x72xbf16>, vector<72x8xbf16>, vector<128x8xf32> -> vector<128x8xf32>
    %61 = vector.shape_cast %60 : vector<128x8xf32> to vector<1x8x16x8xf32>
    %c0_13 = arith.constant 0 : index
    %c0_14 = arith.constant 0 : index
    %c0_15 = arith.constant 0 : index
    %c0_16 = arith.constant 0 : index
    %62 = vector.load %arg6[%c0_13, %c0_14, %c0_15, %c0_16] : memref<1x8x16x8xf32, #tpu.memory_space<vmem>>, vector<1x8x16x8xf32>
    tpu.vector_store %arg6[%c0_13, %c0_14, %c0_15, %c0_16], %61 {strides = array<i32>} : memref<1x8x16x8xf32, #tpu.memory_space<vmem>>, vector<1x8x16x8xf32>,
    %cst_17 = arith.constant dense<0.000000e+00> : vector<8xf32>
    %63 = vector.multi_reduction <add>, %60, %cst_17 [0] : vector<128x8xf32> to vector<8xf32>
    %64 = vector.shape_cast %63 : vector<8xf32> to vector<1x8xf32>
    %65 = arith.mulf %60, %60 : vector<128x8xf32>
    %cst_18 = arith.constant dense<0.000000e+00> : vector<8xf32>
    %66 = vector.multi_reduction <add>, %65, %cst_18 [0] : vector<128x8xf32> to vector<8xf32>
    %67 = vector.shape_cast %66 : vector<8xf32> to vector<1x8xf32>
    %68 = tpu.concatenate %64, %67 in 0 : vector<1x8xf32>, vector<1x8xf32> -> vector<2x8xf32>
    %c0_i32_19 = arith.constant 0 : i32
    %69 = arith.cmpi eq, %arg1, %c0_i32_19 : i32
    %70 = arith.extui %69 : i1 to i32
    %c0_i32_20 = arith.constant 0 : i32
    %71 = arith.cmpi ne, %70, %c0_i32_20 : i32
    scf.if %71 {
      %cst_27 = arith.constant 0.000000e+00 : f32
      %78 = vector.broadcast %cst_27 : f32 to vector<2x8xf32>
      %c0_28 = arith.constant 0 : index
      %c0_29 = arith.constant 0 : index
      %79 = vector.load %arg8[%c0_28, %c0_29] : memref<2x8xf32, #tpu.memory_space<vmem>>, vector<2x8xf32>
      tpu.vector_store %arg8[%c0_28, %c0_29], %78 {strides = array<i32>} : memref<2x8xf32, #tpu.memory_space<vmem>>, vector<2x8xf32>,
    } else {
    }
    %c0_21 = arith.constant 0 : index
    %c0_22 = arith.constant 0 : index
    %72 = vector.load %arg8[%c0_21, %c0_22] : memref<2x8xf32, #tpu.memory_space<vmem>>, vector<2x8xf32>
    %73 = arith.addf %72, %68 : vector<2x8xf32>
    %c0_23 = arith.constant 0 : index
    %c0_24 = arith.constant 0 : index
    %74 = vector.load %arg8[%c0_23, %c0_24] : memref<2x8xf32, #tpu.memory_space<vmem>>, vector<2x8xf32>
    tpu.vector_store %arg8[%c0_23, %c0_24], %73 {strides = array<i32>} : memref<2x8xf32, #tpu.memory_space<vmem>>, vector<2x8xf32>,
    %c1_i32_25 = arith.constant 1 : i32
    %75 = arith.cmpi eq, %arg1, %c1_i32_25 : i32
    %76 = arith.extui %75 : i1 to i32
    %c0_i32_26 = arith.constant 0 : i32
    %77 = arith.cmpi ne, %76, %c0_i32_26 : i32
    scf.if %77 {
      %c0_27 = arith.constant 0 : index
      %c0_28 = arith.constant 0 : index
      %78 = vector.load %arg8[%c0_27, %c0_28] : memref<2x8xf32, #tpu.memory_space<vmem>>, vector<2x8xf32>
      %79 = vector.shape_cast %78 : vector<2x8xf32> to vector<1x2x8xf32>
      %c0_29 = arith.constant 0 : index
      %c0_30 = arith.constant 0 : index
      %c0_31 = arith.constant 0 : index
      %80 = vector.load %arg7[%c0_29, %c0_30, %c0_31] : memref<1x2x8xf32, #tpu.memory_space<vmem>>, vector<1x2x8xf32>
      tpu.vector_store %arg7[%c0_29, %c0_30, %c0_31], %79 {strides = array<i32>} : memref<1x2x8xf32, #tpu.memory_space<vmem>>, vector<1x2x8xf32>,
    } else {
    }
    return
  }
  func.func @transform_0(%arg0: i32, %arg1: i32) -> (i32, i32, i32, i32) {
    %c2_i32 = arith.constant 2 : i32
    %0 = arith.muli %arg0, %c2_i32 : i32
    %1 = arith.addi %0, %arg1 : i32
    %c0_i32 = arith.constant 0 : i32
    %c0_i32_0 = arith.constant 0 : i32
    %c0_i32_1 = arith.constant 0 : i32
    %c0_i32_2 = arith.constant 0 : i32
    return %1, %c0_i32, %c0_i32_0, %c0_i32_1 : i32, i32, i32, i32
  }
  func.func @transform_1(%arg0: i32, %arg1: i32) -> (i32, i32) {
    %c0_i32 = arith.constant 0 : i32
    %c0_i32_0 = arith.constant 0 : i32
    %c0_i32_1 = arith.constant 0 : i32
    return %c0_i32, %c0_i32_0 : i32, i32
  }
  func.func @transform_2(%arg0: i32, %arg1: i32) -> (i32, i32) {
    %c0_i32 = arith.constant 0 : i32
    %c0_i32_0 = arith.constant 0 : i32
    %c0_i32_1 = arith.constant 0 : i32
    return %c0_i32, %c0_i32_0 : i32, i32
  }
  func.func @transform_3(%arg0: i32, %arg1: i32) -> (i32, i32) {
    %c0_i32 = arith.constant 0 : i32
    %c0_i32_0 = arith.constant 0 : i32
    %c0_i32_1 = arith.constant 0 : i32
    return %c0_i32, %c0_i32_0 : i32, i32
  }
  func.func @transform_4(%arg0: i32, %arg1: i32) -> (i32, i32, i32, i32) {
    %c0_i32 = arith.constant 0 : i32
    %c0_i32_0 = arith.constant 0 : i32
    %c0_i32_1 = arith.constant 0 : i32
    return %arg0, %arg1, %c0_i32, %c0_i32_0 : i32, i32, i32, i32
  }
  func.func @transform_5(%arg0: i32, %arg1: i32) -> (i32, i32, i32) {
    %c0_i32 = arith.constant 0 : i32
    %c0_i32_0 = arith.constant 0 : i32
    %c0_i32_1 = arith.constant 0 : i32
    return %arg0, %c0_i32, %c0_i32_0 : i32, i32, i32
  }
}

module attributes {stable_mosaic.version = 11 : i64} {
  func.func @_bn2_residual_kernel(%arg0: i32, %arg1: memref<8x128xf32, #tpu.memory_space<vmem>>, %arg2: memref<8x128xf32, #tpu.memory_space<vmem>>, %arg3: memref<1x128xf32, #tpu.memory_space<vmem>>, %arg4: memref<1x128xf32, #tpu.memory_space<vmem>>, %arg5: memref<8x128xf32, #tpu.memory_space<vmem>>) attributes {dimension_semantics = [#tpu.dimension_semantics<parallel>], iteration_bounds = array<i64: 4>, scalar_prefetch = 0 : i64, scratch_operands = 0 : i64, tpu.core_type = #tpu.core_type<tc>, window_params = [{transform_indices = @transform_0, window_bounds = array<i64: 8, 128>}, {transform_indices = @transform_1, window_bounds = array<i64: 8, 128>}, {pipeline_mode = #tpu.pipeline_mode<synchronous>, transform_indices = @transform_2, window_bounds = array<i64: 1, 128>}, {pipeline_mode = #tpu.pipeline_mode<synchronous>, transform_indices = @transform_3, window_bounds = array<i64: 1, 128>}, {transform_indices = @transform_4, window_bounds = array<i64: 8, 128>}]} {
    %c0 = arith.constant 0 : index
    %c0_0 = arith.constant 0 : index
    %0 = vector.load %arg1[%c0, %c0_0] : memref<8x128xf32, #tpu.memory_space<vmem>>, vector<8x128xf32>
    %c0_1 = arith.constant 0 : index
    %c0_2 = arith.constant 0 : index
    %1 = vector.load %arg3[%c0_1, %c0_2] : memref<1x128xf32, #tpu.memory_space<vmem>>, vector<1x128xf32>
    %2 = vector.broadcast %1 : vector<1x128xf32> to vector<8x128xf32>
    %3 = arith.mulf %0, %2 : vector<8x128xf32>
    %c0_3 = arith.constant 0 : index
    %c0_4 = arith.constant 0 : index
    %4 = vector.load %arg4[%c0_3, %c0_4] : memref<1x128xf32, #tpu.memory_space<vmem>>, vector<1x128xf32>
    %5 = vector.broadcast %4 : vector<1x128xf32> to vector<8x128xf32>
    %6 = arith.addf %3, %5 : vector<8x128xf32>
    %cst = arith.constant 1.000000e-01 : f32
    %7 = vector.broadcast %cst : f32 to vector<8x128xf32>
    %8 = arith.mulf %6, %7 : vector<8x128xf32>
    %c0_5 = arith.constant 0 : index
    %c0_6 = arith.constant 0 : index
    %9 = vector.load %arg2[%c0_5, %c0_6] : memref<8x128xf32, #tpu.memory_space<vmem>>, vector<8x128xf32>
    %10 = arith.addf %8, %9 : vector<8x128xf32>
    %c0_7 = arith.constant 0 : index
    %c0_8 = arith.constant 0 : index
    %11 = vector.load %arg5[%c0_7, %c0_8] : memref<8x128xf32, #tpu.memory_space<vmem>>, vector<8x128xf32>
    tpu.vector_store %arg5[%c0_7, %c0_8], %10 {strides = array<i32>} : memref<8x128xf32, #tpu.memory_space<vmem>>, vector<8x128xf32>,
    return
  }
  func.func @transform_0(%arg0: i32) -> (i32, i32) {
    %c0_i32 = arith.constant 0 : i32
    %c0_i32_0 = arith.constant 0 : i32
    return %arg0, %c0_i32 : i32, i32
  }
  func.func @transform_1(%arg0: i32) -> (i32, i32) {
    %c0_i32 = arith.constant 0 : i32
    %c0_i32_0 = arith.constant 0 : i32
    return %arg0, %c0_i32 : i32, i32
  }
  func.func @transform_2(%arg0: i32) -> (i32, i32) {
    %c0_i32 = arith.constant 0 : i32
    %c0_i32_0 = arith.constant 0 : i32
    %c0_i32_1 = arith.constant 0 : i32
    return %c0_i32, %c0_i32_0 : i32, i32
  }
  func.func @transform_3(%arg0: i32) -> (i32, i32) {
    %c0_i32 = arith.constant 0 : i32
    %c0_i32_0 = arith.constant 0 : i32
    %c0_i32_1 = arith.constant 0 : i32
    return %c0_i32, %c0_i32_0 : i32, i32
  }
  func.func @transform_4(%arg0: i32) -> (i32, i32) {
    %c0_i32 = arith.constant 0 : i32
    %c0_i32_0 = arith.constant 0 : i32
    return %arg0, %c0_i32 : i32, i32
  }
}

</mosaic_0001>

<llo_original>
// kernel: _lambda_.3
$region0: #{_lambda_.3}
  #allocation0 [shape = 'u32[]', space=smem, size = 0x4, offset = 0x4, fixed_abs, tag = 'smem constant byte address 0x4 - core index']
  #allocation1 [shape = 'u32[144,128]{1,0:T(1,128)}', space=vmem, size = 0x12000, scoped, tag = 'internal scratch']
  #allocation2 [shape = 'f32[2,8]{1,0:T(2,128)}', space=vmem, size = 0x400, scoped, tag = 'scratch operand']
  %s0 = inlined_call_operand.vmem [shape: bf16[4,10,16,8], index: 0, kind: input, shape index: {}]
  %s1 = inlined_call_operand.vmem [shape: bf16[72,8], index: 1, kind: input, shape index: {}]
  %s2 = inlined_call_operand.vmem [shape: f32[2,16,16,8], index: 2, kind: output, shape index: {0}]
  %s3 = inlined_call_operand.vmem [shape: f32[2,2,8], index: 3, kind: output, shape index: {1}]
  %4 = xla_tuple %s2, %s3
  %s5 = sld [smem:[#allocation0]]
  $region57: #{_lambda_.3} parent=0
    _
  %s7 = ssub.s32 1, %s5
  %s8 = scalar_select 0, %s7, %s5
  loop: start=0, step=1, limit=6
  $region2: #{_lambda_.3} parent=0 // loop_pre_header
    _
  $region3: #{_lambda_.3} parent=0 // loop_header
    %s10 = sphi 0, %s14
    %p11 = scmp.ge.s32.totalorder %s10, 6
    %s17 = sphi 0, %s29
    %s18 = sphi 0, %s25
    %s19 = sphi 0, %s17
    %s20 = sphi 0, %s18
    %s21 = sphi 0, %s19
    %s22 = sphi 0, %s20
    %s36 = sphi 0, %s38
    %s39 = sphi 0, %s36
    %s40 = sphi 0, %s39
    %s56 = sphi 0, %s40
    %s60 = sphi 0, %s60
    %s62 = sphi 0, %s60
    %s63 = sphi 0, %s62
    %s77 = sphi 0, %s63
    %s85 = sphi 0, %s87
    %s88 = sphi 0, %s85
    %s89 = sphi 0, %s88
    %s105 = sphi 0, %s89
    %s111 = sphi 0, %s113
    %s114 = sphi 0, %s111
    %s115 = sphi 0, %s114
    %s131 = sphi 0, %s115
  $region4: #{_lambda_.3} parent=0 // loop_header_branch
    %13 = sbr.rel (%p11) target = $region8
  $region5: #{_lambda_.3} parent=0 // loop_body
    %s15 = ssub.s32 %s10, 1
    %s16 = ssub.s32 %s10, 2
    %s23 = sadd.s32 1, %s18
    %p24 = scmp.ge.s32.totalorder %s23, 2
    %s25 = scalar_select %p24, 0, %s23
    %s26 = sadd.s32 1, %s17
    %s27 = scalar_select %p24, %s26, %s17
    %p28 = scmp.ge.s32.totalorder %s27, 2
    %s29 = scalar_select %p28, 0, %s27
    %s30 = smul.u32 %s17, 2
    %s31 = sadd.s32 %s30, %s18
    %s32 = smul.u32 %s29, 2
    %s33 = sadd.s32 %s32, %s25
    %s34 = ssub.s32 %s31, %s33
    %p35 = scmp.eq.s32.totalorder %s34, 0
    %s37 = sadd.s32 %s36, 1
    %s38 = scalar_select %p35, %s36, %s37
    %p41 = pneg %p35
    %p42 = scmp.eq.s32.totalorder %s10, 3
    %p43 = por %p41, %p42
    %p44 = scmp.ne.s32.totalorder %s36, %s39
    %p45 = scmp.eq.s32.totalorder %s10, 0
    %p46 = por %p44, %p45
    %p47 = scmp.ne.s32.totalorder %s36, %s39
    %p48 = scmp.eq.s32.totalorder %s15, 3
    %p49 = por %p47, %p48
    %p50 = scmp.ne.s32.totalorder %s39, %s40
    %p51 = scmp.eq.s32.totalorder %s15, 0
    %p52 = por %p50, %p51
    %p53 = scmp.ne.s32.totalorder %s39, %s40
    %p54 = scmp.eq.s32.totalorder %s16, 3
    %p55 = por %p53, %p54
    %p57 = scmp.ne.s32.totalorder %s40, %s56
    %p58 = scmp.eq.s32.totalorder %s16, 0
    %p59 = por %p57, %p58
    %s61 = sadd.s32 %s60, 1
    %p64 = scmp.eq.s32.totalorder %s10, 3
    %p65 = scmp.ne.s32.totalorder %s60, %s62
    %p66 = scmp.eq.s32.totalorder %s10, 0
    %p67 = por %p65, %p66
    %p68 = scmp.ne.s32.totalorder %s60, %s62
    %p69 = scmp.eq.s32.totalorder %s15, 3
    %p70 = por %p68, %p69
    %p71 = scmp.ne.s32.totalorder %s62, %s63
    %p72 = scmp.eq.s32.totalorder %s15, 0
    %p73 = por %p71, %p72
    %p74 = scmp.ne.s32.totalorder %s62, %s63
    %p75 = scmp.eq.s32.totalorder %s16, 3
    %p76 = por %p74, %p75
    %p78 = scmp.ne.s32.totalorder %s63, %s77
    %p79 = scmp.eq.s32.totalorder %s16, 0
    %p80 = por %p78, %p79
    %s81 = ssub.s32 %s17, %s29
    %s82 = ssub.s32 %s18, %s25
    %s83 = sor.u32 %s81, %s82
    %p84 = scmp.eq.s32.totalorder %s83, 0
    %s86 = sadd.s32 %s85, 1
    %s87 = scalar_select %p84, %s85, %s86
    %p90 = pneg %p84
    %p91 = scmp.eq.s32.totalorder %s10, 3
    %p92 = por %p90, %p91
    %p93 = scmp.ne.s32.totalorder %s85, %s88
    %p94 = scmp.eq.s32.totalorder %s10, 0
    %p95 = por %p93, %p94
    %p96 = scmp.ne.s32.totalorder %s85, %s88
    %p97 = scmp.eq.s32.totalorder %s15, 3
    %p98 = por %p96, %p97
    %p99 = scmp.ne.s32.totalorder %s88, %s89
    %p100 = scmp.eq.s32.totalorder %s15, 0
    %p101 = por %p99, %p100
    %p102 = scmp.ne.s32.totalorder %s88, %s89
    %p103 = scmp.eq.s32.totalorder %s16, 3
    %p104 = por %p102, %p103
    %p106 = scmp.ne.s32.totalorder %s89, %s105
    %p107 = scmp.eq.s32.totalorder %s16, 0
    %p108 = por %p106, %p107
    %s109 = ssub.s32 %s17, %s29
    %p110 = scmp.eq.s32.totalorder %s109, 0
    %s112 = sadd.s32 %s111, 1
    %s113 = scalar_select %p110, %s111, %s112
    %p116 = pneg %p110
    %p117 = scmp.eq.s32.totalorder %s10, 3
    %p118 = por %p116, %p117
    %p119 = scmp.ne.s32.totalorder %s111, %s114
    %p120 = scmp.eq.s32.totalorder %s10, 0
    %p121 = por %p119, %p120
    %p122 = scmp.ne.s32.totalorder %s111, %s114
    %p123 = scmp.eq.s32.totalorder %s15, 3
    %p124 = por %p122, %p123
    %p125 = scmp.ne.s32.totalorder %s114, %s115
    %p126 = scmp.eq.s32.totalorder %s15, 0
    %p127 = por %p125, %p126
    %p128 = scmp.ne.s32.totalorder %s114, %s115
    %p129 = scmp.eq.s32.totalorder %s16, 3
    %p130 = por %p128, %p129
    %p132 = scmp.ne.s32.totalorder %s115, %s131
    %p133 = scmp.eq.s32.totalorder %s16, 0
    %p134 = por %p132, %p133
    %p135 = scmp.le.s32.totalorder 1, %s10
    %p136 = scmp.lt.s32.totalorder %s10, 5
    %p137 = pnand %p135, %p136
    %p138 = pneg %p137
    // Predicated region
    $region9: #{_lambda_.3} parent=5 // pred_check
      _
    $region10: #{_lambda_.3} parent=5 // pred_check_branch
      %140 = sbr.rel (%p137) target = $region12
    $region11: #{_lambda_.3} parent=5 // pred_region
      %s141 = ssub.s32 %s10, 1
      // Predicated region
      $region13: #{_lambda_.3} parent=11 // pred_check
        %p142 = pneg %p73
      $region14: #{_lambda_.3} parent=11 // pred_check_branch
        %144 = sbr.rel (%p142) target = $region16
      $region15: #{_lambda_.3} parent=11 // pred_region
        _
      $region16: #{_lambda_.3} parent=11 // pred_fallthru
        _
    $region12: #{_lambda_.3} parent=5 // pred_fallthru
      _
    %p145 = scmp.lt.s32.totalorder %s10, 4
    // Predicated region
    $region17: #{_lambda_.3} parent=5 // pred_check
      %p146 = pneg %p145
    $region18: #{_lambda_.3} parent=5 // pred_check_branch
      %148 = sbr.rel (%p146) target = $region20
    $region19: #{_lambda_.3} parent=5 // pred_region
      // Predicated region
      $region21: #{_lambda_.3} parent=19 // pred_check
        %p149 = pneg %p46
      $region22: #{_lambda_.3} parent=19 // pred_check_branch
        %151 = sbr.rel (%p149) target = $region24
      $region23: #{_lambda_.3} parent=19 // pred_region
        %s152 = smul.u32 %s17, 2
        %s153 = sadd.s32 %s152, %s18
        %p154 = scmp.lt.s32.totalorder %s153, 3
        %s155 = scalar_select %p154, %s153, 3
        %s156 = smul.addr %s155, 20
        %s157 = smul.addr %s156, 4
        %s158 = scalar_lea.vmem %s0, %s157
        %s159 = smul.u32 %s17, 2
        %s160 = sadd.s32 %s159, %s18
      $region24: #{_lambda_.3} parent=19 // pred_fallthru
        _
    $region20: #{_lambda_.3} parent=5 // pred_fallthru
      _
    %p161 = scmp.le.s32.totalorder 1, %s10
    %p162 = scmp.lt.s32.totalorder %s10, 5
    %p163 = pnand %p161, %p162
    %p164 = pneg %p163
    // Predicated region
    $region25: #{_lambda_.3} parent=5 // pred_check
      _
    $region26: #{_lambda_.3} parent=5 // pred_check_branch
      %166 = sbr.rel (%p163) target = $region28
    $region27: #{_lambda_.3} parent=5 // pred_region
      %s167 = ssub.s32 %s10, 1
      %s168 = smul.u32 %s19, 2
      %s169 = sadd.s32 %s168, %s20
      %p170 = scmp.lt.s32.totalorder %s169, 3
      %s171 = scalar_select %p170, %s169, 3
      %s172 = smul.addr %s171, 20
      %s173 = smul.addr %s172, 4
      %s174 = scalar_lea.vmem %s0, %s173
      %p175 = pneg %p52
      %p176 = pneg %p49
      %p177 = pneg %p73
      %p178 = pneg %p70
      %p179 = pneg %p101
      %p180 = pneg %p98
      %s181 = smul.u32 8, %s20
      %p182 = scmp.lt.s32.totalorder %s19, 1
      %s183 = scalar_select %p182, %s19, 1
      %p184 = scmp.lt.s32.totalorder %s181, 15
      %s185 = scalar_select %p184, %s181, 15
      %s186 = smul.addr %s185, 2
      %s187 = smul.addr %s183, 32
      %s188 = sadd.s32 %s186, %s187
      %s189 = smul.addr %s188, 8
      %s190 = scalar_lea.vmem %s2, %s189
      %p191 = pneg %p127
      %p192 = pneg %p124
      %p193 = scmp.lt.s32.totalorder %s19, 1
      %s194 = scalar_select %p193, %s19, 1
      %s195 = smul.addr %s194, 2
      %s196 = scalar_lea.vmem %s3, %s195
      %s197 = smul.u32 %s19, 2
      %s198 = sadd.s32 %s197, %s20
      %p199 = scmp.lt.s32.totalorder %s198, 3
      %s200 = scalar_select %p199, %s198, 3
      %s201 = smul.addr %s200, 20
      %s202 = smul.addr %s201, 4
      %s203 = scalar_lea.vmem %s0, %s202
      %s204 = smul.u32 %s19, 2
      %s205 = sadd.s32 %s204, %s20
      %s206 = smul.u32 8, %s20
      %p207 = scmp.lt.s32.totalorder %s19, 1
      %s208 = scalar_select %p207, %s19, 1
      %p209 = scmp.lt.s32.totalorder %s206, 15
      %s210 = scalar_select %p209, %s206, 15
      %s211 = smul.addr %s210, 2
      %s212 = smul.addr %s208, 32
      %s213 = sadd.s32 %s211, %s212
      %s214 = smul.addr %s213, 8
      %s215 = scalar_lea.vmem %s2, %s214
      %s216 = smul.u32 8, %s20
      %p217 = scmp.lt.s32.totalorder %s19, 1
      %s218 = scalar_select %p217, %s19, 1
      %s219 = smul.addr %s218, 2
      %s220 = scalar_lea.vmem %s3, %s219
      %v222 = vld [vmem:[%s203] sm:$0xf]
      %v223 = vld [vmem:[%s203 + $0x4] sm:$0xf]
      %v224 = vld [vmem:[%s203 + $0x8] sm:$0xf]
      %v225 = vld [vmem:[%s203 + $0xc] sm:$0xf]
      %v226 = vld [vmem:[%s203 + $0x10] sm:$0xf]
      %v227 = vld [vmem:[%s203 + $0x14] sm:$0xf]
      %v228 = vld [vmem:[%s203 + $0x18] sm:$0xf]
      %v229 = vld [vmem:[%s203 + $0x1c] sm:$0xf]
      %v230 = vld [vmem:[%s203 + $0x20] sm:$0xf]
      %v231 = vld [vmem:[%s203 + $0x24] sm:$0xf]
      %v232 = vld [vmem:[%s203 + $0x28] sm:$0xf]
      %v233 = vld [vmem:[%s203 + $0x2c] sm:$0xf]
      %v234 = vld [vmem:[%s203 + $0x30] sm:$0xf]
      %v235 = vld [vmem:[%s203 + $0x34] sm:$0xf]
      %v236 = vld [vmem:[%s203 + $0x38] sm:$0xf]
      %v237 = vld [vmem:[%s203 + $0x3c] sm:$0xf]
      %v238 = vld [vmem:[%s203 + $0x40] sm:$0xf]
      %v239 = vld [vmem:[%s203 + $0x44] sm:$0xf]
      %v240 = vld [vmem:[%s203 + $0x48] sm:$0xf]
      %v241 = vld [vmem:[%s203 + $0x4c] sm:$0xf]
      %v242 = vld [vmem:[%s1] sm:$0xf]
      %v243 = vld [vmem:[%s1 + $0x4] sm:$0xf]
      %v244 = vld [vmem:[%s1 + $0x8] sm:$0xf]
      %v245 = vld [vmem:[%s1 + $0xc] sm:$0xf]
      %v246 = vld [vmem:[%s1 + $0x10] sm:$0xf]
      %v247 = vld [vmem:[%s1 + $0x14] sm:$0xf]
      %v248 = vld [vmem:[%s1 + $0x18] sm:$0xf]
      %v249 = vld [vmem:[%s1 + $0x1c] sm:$0xf]
      %v250 = vld [vmem:[%s1 + $0x20] sm:$0xf]
      %v267 = vunpack.c.l.b16 %v222
      %v268 = vunpack.c.l.b16 %v223
      %v269 = vunpack.c.l.b16 %v224
      %v270 = vunpack.c.l.b16 %v225
      %v271 = vunpack.c.l.b16 %v226
      %v272 = vunpack.c.l.b16 %v227
      %v273 = vunpack.c.l.b16 %v228
      %v274 = vunpack.c.l.b16 %v229
      %v275 = vunpack.c.l.b16 %v230
      %v276 = vunpack.c.l.b16 %v231
      %v277 = vunpack.c.l.b16 %v232
      %v278 = vunpack.c.l.b16 %v233
      %v279 = vunpack.c.l.b16 %v234
      %v280 = vunpack.c.l.b16 %v235
      %v281 = vunpack.c.l.b16 %v236
      %v282 = vunpack.c.l.b16 %v237
      %v283 = vpack.c.b16 %v268, %v267
      %v284 = vpack.c.b16 %v270, %v269
      %v285 = vpack.c.b16 %v272, %v271
      %v286 = vpack.c.b16 %v274, %v273
      %v287 = vpack.c.b16 %v276, %v275
      %v288 = vpack.c.b16 %v278, %v277
      %v289 = vpack.c.b16 %v280, %v279
      %v290 = vpack.c.b16 %v282, %v281
      %v292 = vshrl.u32 %v283, 16
      %v294 = vrot.slane %v292, 7
      %v295 = vshll.u32 %v283, 16
      %v297 = vor.u32 %v294, %v295
      %v299 = vshrl.u32 %v284, 16
      %v301 = vrot.slane %v299, 7
      %v302 = vshll.u32 %v284, 16
      %v304 = vor.u32 %v301, %v302
      %v306 = vshrl.u32 %v285, 16
      %v308 = vrot.slane %v306, 7
      %v309 = vshll.u32 %v285, 16
      %v311 = vor.u32 %v308, %v309
      %v313 = vshrl.u32 %v286, 16
      %v315 = vrot.slane %v313, 7
      %v316 = vshll.u32 %v286, 16
      %v318 = vor.u32 %v315, %v316
      %v320 = vshrl.u32 %v287, 16
      %v322 = vrot.slane %v320, 7
      %v323 = vshll.u32 %v287, 16
      %v325 = vor.u32 %v322, %v323
      %v327 = vshrl.u32 %v288, 16
      %v329 = vrot.slane %v327, 7
      %v330 = vshll.u32 %v288, 16
      %v332 = vor.u32 %v329, %v330
      %v334 = vshrl.u32 %v289, 16
      %v336 = vrot.slane %v334, 7
      %v337 = vshll.u32 %v289, 16
      %v339 = vor.u32 %v336, %v337
      %v341 = vshrl.u32 %v290, 16
      %v343 = vrot.slane %v341, 7
      %v344 = vshll.u32 %v290, 16
      %v346 = vor.u32 %v343, %v344
      %vm355 = vcmask 1040384
      %vm356 = vsmask.f32 256
      %vm357 = vmand %vm355, %vm356
      %v358 = vsel %vm357, 0, %v297
      %v359 = vsel %vm357, 0, %v304
      %v360 = vsel %vm357, 0, %v311
      %v361 = vsel %vm357, 0, %v318
      %v362 = vsel %vm357, 0, %v325
      %v363 = vsel %vm357, 0, %v332
      %v364 = vsel %vm357, 0, %v339
      %v365 = vsel %vm357, 0, %v346
      %v366 = vrot.slane %v295, 1
      %v367 = vor.u32 %v292, %v366
      %v368 = vrot.slane %v302, 1
      %v369 = vor.u32 %v299, %v368
      %v370 = vrot.slane %v309, 1
      %v371 = vor.u32 %v306, %v370
      %v372 = vrot.slane %v316, 1
      %v373 = vor.u32 %v313, %v372
      %v374 = vrot.slane %v323, 1
      %v375 = vor.u32 %v320, %v374
      %v376 = vrot.slane %v330, 1
      %v377 = vor.u32 %v327, %v376
      %v378 = vrot.slane %v337, 1
      %v379 = vor.u32 %v334, %v378
      %v380 = vrot.slane %v344, 1
      %v381 = vor.u32 %v341, %v380
      %vm390 = vcmask 1047552
      %vm391 = vsmask.f32 7424
      %vm392 = vmand %vm390, %vm391
      %v393 = vsel %vm392, %v367, 0
      %v394 = vsel %vm392, %v369, 0
      %v395 = vsel %vm392, %v371, 0
      %v396 = vsel %vm392, %v373, 0
      %v397 = vsel %vm392, %v375, 0
      %v398 = vsel %vm392, %v377, 0
      %v399 = vsel %vm392, %v379, 0
      %v400 = vsel %vm392, %v381, 0
      %v403 = vunpack.c.l.b16 %v238
      %v404 = vunpack.c.l.b16 %v239
      %v405 = vpack.c.b16 %v404, %v403
      %v407 = vshrl.u32 %v405, 16
      %v409 = vrot.slane %v407, 7
      %v410 = vshll.u32 %v405, 16
      %v412 = vor.u32 %v409, %v410
      %v414 = vsel %vm357, 0, %v412
      %v415 = vrot.slane %v410, 1
      %v416 = vor.u32 %v407, %v415
      %v418 = vsel %vm392, %v416, 0
      %v421 = vunpack.c.l.b16 %v240
      %v422 = vunpack.c.l.b16 %v241
      %v423 = vpack.c.b16 %v422, %v421
      %v425 = vshrl.u32 %v423, 16
      %v427 = vrot.slane %v425, 7
      %v428 = vshll.u32 %v423, 16
      %v430 = vor.u32 %v427, %v428
      %v432 = vsel %vm357, 0, %v430
      %v433 = vrot.slane %v428, 1
      %v434 = vor.u32 %v425, %v433
      %v436 = vsel %vm392, %v434, 0
      %437 = vrot.lane.b32.xlu0 %v283, 8
      %v438 = vpop.permute.xlu0 %437
      %439 = vrot.lane.b32.xlu0 %v284, 8
      %v440 = vpop.permute.xlu0 %439
      %441 = vrot.lane.b32.xlu0 %v285, 8
      %v442 = vpop.permute.xlu0 %441
      %443 = vrot.lane.b32.xlu0 %v286, 8
      %v444 = vpop.permute.xlu0 %443
      %445 = vrot.lane.b32.xlu0 %v287, 8
      %v446 = vpop.permute.xlu0 %445
      %447 = vrot.lane.b32.xlu0 %v288, 8
      %v448 = vpop.permute.xlu0 %447
      %449 = vrot.lane.b32.xlu0 %v289, 8
      %v450 = vpop.permute.xlu0 %449
      %451 = vrot.lane.b32.xlu0 %v290, 8
      %v452 = vpop.permute.xlu0 %451
      %461 = vrot.lane.b32.xlu0 %v393, 16
      %v462 = vpop.permute.xlu0 %461
      %463 = vrot.lane.b32.xlu0 %v394, 16
      %v464 = vpop.permute.xlu0 %463
      %465 = vrot.lane.b32.xlu0 %v395, 16
      %v466 = vpop.permute.xlu0 %465
      %467 = vrot.lane.b32.xlu0 %v396, 16
      %v468 = vpop.permute.xlu0 %467
      %469 = vrot.lane.b32.xlu0 %v397, 16
      %v470 = vpop.permute.xlu0 %469
      %471 = vrot.lane.b32.xlu0 %v398, 16
      %v472 = vpop.permute.xlu0 %471
      %473 = vrot.lane.b32.xlu0 %v399, 16
      %v474 = vpop.permute.xlu0 %473
      %475 = vrot.lane.b32.xlu0 %v400, 16
      %v476 = vpop.permute.xlu0 %475
      %485 = vrot.lane.b32.xlu0 %v359, 24
      %v486 = vpop.permute.xlu0 %485
      %487 = vrot.lane.b32.xlu0 %v360, 24
      %v488 = vpop.permute.xlu0 %487
      %489 = vrot.lane.b32.xlu0 %v361, 24
      %v490 = vpop.permute.xlu0 %489
      %491 = vrot.lane.b32.xlu0 %v362, 24
      %v492 = vpop.permute.xlu0 %491
      %493 = vrot.lane.b32.xlu0 %v363, 24
      %v494 = vpop.permute.xlu0 %493
      %495 = vrot.lane.b32.xlu0 %v364, 24
      %v496 = vpop.permute.xlu0 %495
      %497 = vrot.lane.b32.xlu0 %v365, 24
      %v498 = vpop.permute.xlu0 %497
      %499 = vrot.lane.b32.xlu0 %v414, 24
      %v500 = vpop.permute.xlu0 %499
      %501 = vrot.lane.b32.xlu0 %v284, 32
      %v502 = vpop.permute.xlu0 %501
      %503 = vrot.lane.b32.xlu0 %v285, 32
      %v504 = vpop.permute.xlu0 %503
      %505 = vrot.lane.b32.xlu0 %v286, 32
      %v506 = vpop.permute.xlu0 %505
      %507 = vrot.lane.b32.xlu0 %v287, 32
      %v508 = vpop.permute.xlu0 %507
      %509 = vrot.lane.b32.xlu0 %v288, 32
      %v510 = vpop.permute.xlu0 %509
      %511 = vrot.lane.b32.xlu0 %v289, 32
      %v512 = vpop.permute.xlu0 %511
      %513 = vrot.lane.b32.xlu0 %v290, 32
      %v514 = vpop.permute.xlu0 %513
      %515 = vrot.lane.b32.xlu0 %v405, 32
      %v516 = vpop.permute.xlu0 %515
      %518 = vrot.lane.b32.xlu0 %v394, 40
      %v519 = vpop.permute.xlu0 %518
      %520 = vrot.lane.b32.xlu0 %v395, 40
      %v521 = vpop.permute.xlu0 %520
      %522 = vrot.lane.b32.xlu0 %v396, 40
      %v523 = vpop.permute.xlu0 %522
      %524 = vrot.lane.b32.xlu0 %v397, 40
      %v525 = vpop.permute.xlu0 %524
      %526 = vrot.lane.b32.xlu0 %v398, 40
      %v527 = vpop.permute.xlu0 %526
      %528 = vrot.lane.b32.xlu0 %v399, 40
      %v529 = vpop.permute.xlu0 %528
      %530 = vrot.lane.b32.xlu0 %v400, 40
      %v531 = vpop.permute.xlu0 %530
      %532 = vrot.lane.b32.xlu0 %v418, 40
      %v533 = vpop.permute.xlu0 %532
      %535 = vrot.lane.b32.xlu0 %v360, 48
      %v536 = vpop.permute.xlu0 %535
      %537 = vrot.lane.b32.xlu0 %v361, 48
      %v538 = vpop.permute.xlu0 %537
      %539 = vrot.lane.b32.xlu0 %v362, 48
      %v540 = vpop.permute.xlu0 %539
      %541 = vrot.lane.b32.xlu0 %v363, 48
      %v542 = vpop.permute.xlu0 %541
      %543 = vrot.lane.b32.xlu0 %v364, 48
      %v544 = vpop.permute.xlu0 %543
      %545 = vrot.lane.b32.xlu0 %v365, 48
      %v546 = vpop.permute.xlu0 %545
      %547 = vrot.lane.b32.xlu0 %v414, 48
      %v548 = vpop.permute.xlu0 %547
      %549 = vrot.lane.b32.xlu0 %v432, 48
      %v550 = vpop.permute.xlu0 %549
      %551 = vrot.lane.b32.xlu0 %v285, 56
      %v552 = vpop.permute.xlu0 %551
      %553 = vrot.lane.b32.xlu0 %v286, 56
      %v554 = vpop.permute.xlu0 %553
      %555 = vrot.lane.b32.xlu0 %v287, 56
      %v556 = vpop.permute.xlu0 %555
      %557 = vrot.lane.b32.xlu0 %v288, 56
      %v558 = vpop.permute.xlu0 %557
      %559 = vrot.lane.b32.xlu0 %v289, 56
      %v560 = vpop.permute.xlu0 %559
      %561 = vrot.lane.b32.xlu0 %v290, 56
      %v562 = vpop.permute.xlu0 %561
      %563 = vrot.lane.b32.xlu0 %v405, 56
      %v564 = vpop.permute.xlu0 %563
      %565 = vrot.lane.b32.xlu0 %v423, 56
      %v566 = vpop.permute.xlu0 %565
      %568 = vrot.lane.b32.xlu0 %v395, 64
      %v569 = vpop.permute.xlu0 %568
      %570 = vrot.lane.b32.xlu0 %v396, 64
      %v571 = vpop.permute.xlu0 %570
      %572 = vrot.lane.b32.xlu0 %v397, 64
      %v573 = vpop.permute.xlu0 %572
      %574 = vrot.lane.b32.xlu0 %v398, 64
      %v575 = vpop.permute.xlu0 %574
      %576 = vrot.lane.b32.xlu0 %v399, 64
      %v577 = vpop.permute.xlu0 %576
      %578 = vrot.lane.b32.xlu0 %v400, 64
      %v579 = vpop.permute.xlu0 %578
      %580 = vrot.lane.b32.xlu0 %v418, 64
      %v581 = vpop.permute.xlu0 %580
      %582 = vrot.lane.b32.xlu0 %v436, 64
      %v583 = vpop.permute.xlu0 %582
      %vm584 = vcmask 64512
      %v587 = vsel %vm584, %v358, %v438
      %v590 = vsel %vm584, %v359, %v440
      %v593 = vsel %vm584, %v360, %v442
      %v596 = vsel %vm584, %v361, %v444
      %v599 = vsel %vm584, %v362, %v446
      %v602 = vsel %vm584, %v363, %v448
      %v605 = vsel %vm584, %v364, %v450
      %v608 = vsel %vm584, %v365, %v452
      %vm609 = vcmask 130048
      %v611 = vsel %vm609, %v587, %v462
      %v613 = vsel %vm609, %v590, %v464
      %v615 = vsel %vm609, %v593, %v466
      %v617 = vsel %vm609, %v596, %v468
      %v619 = vsel %vm609, %v599, %v470
      %v621 = vsel %vm609, %v602, %v472
      %v623 = vsel %vm609, %v605, %v474
      %v625 = vsel %vm609, %v608, %v476
      %vm626 = vcmask 195584
      %v628 = vsel %vm626, %v611, %v486
      %v630 = vsel %vm626, %v613, %v488
      %v632 = vsel %vm626, %v615, %v490
      %v634 = vsel %vm626, %v617, %v492
      %v636 = vsel %vm626, %v619, %v494
      %v638 = vsel %vm626, %v621, %v496
      %v640 = vsel %vm626, %v623, %v498
      %v642 = vsel %vm626, %v625, %v500
      %vm643 = vcmask 261120
      %v645 = vsel %vm643, %v628, %v502
      %v647 = vsel %vm643, %v630, %v504
      %v649 = vsel %vm643, %v632, %v506
      %v651 = vsel %vm643, %v634, %v508
      %v653 = vsel %vm643, %v636, %v510
      %v655 = vsel %vm643, %v638, %v512
      %v657 = vsel %vm643, %v640, %v514
      %v659 = vsel %vm643, %v642, %v516
      %vm660 = vcmask 326656
      %v662 = vsel %vm660, %v645, %v519
      %v664 = vsel %vm660, %v647, %v521
      %v666 = vsel %vm660, %v649, %v523
      %v668 = vsel %vm660, %v651, %v525
      %v670 = vsel %vm660, %v653, %v527
      %v672 = vsel %vm660, %v655, %v529
      %v674 = vsel %vm660, %v657, %v531
      %v676 = vsel %vm660, %v659, %v533
      %vm677 = vcmask 392192
      %v679 = vsel %vm677, %v662, %v536
      %v681 = vsel %vm677, %v664, %v538
      %v683 = vsel %vm677, %v666, %v540
      %v685 = vsel %vm677, %v668, %v542
      %v687 = vsel %vm677, %v670, %v544
      %v689 = vsel %vm677, %v672, %v546
      %v691 = vsel %vm677, %v674, %v548
      %v693 = vsel %vm677, %v676, %v550
      %vm694 = vcmask 457728
      %v696 = vsel %vm694, %v679, %v552
      %v698 = vsel %vm694, %v681, %v554
      %v700 = vsel %vm694, %v683, %v556
      %v702 = vsel %vm694, %v685, %v558
      %v704 = vsel %vm694, %v687, %v560
      %v706 = vsel %vm694, %v689, %v562
      %v708 = vsel %vm694, %v691, %v564
      %v710 = vsel %vm694, %v693, %v566
      %vm711 = vcmask 523264
      %v713 = vsel %vm711, %v696, %v569
      %v715 = vsel %vm711, %v698, %v571
      %v717 = vsel %vm711, %v700, %v573
      %v719 = vsel %vm711, %v702, %v575
      %v721 = vsel %vm711, %v704, %v577
      %v723 = vsel %vm711, %v706, %v579
      %v725 = vsel %vm711, %v708, %v581
      %v727 = vsel %vm711, %v710, %v583
      %v737 = vunpack.c.l.b16 %v242
      %v738 = vunpack.c.l.b16 %v243
      %v739 = vunpack.c.l.b16 %v244
      %v740 = vunpack.c.l.b16 %v245
      %v741 = vunpack.c.l.b16 %v246
      %v742 = vunpack.c.l.b16 %v247
      %v743 = vunpack.c.l.b16 %v248
      %v744 = vunpack.c.l.b16 %v249
      %v745 = vunpack.c.l.b16 %v250
      %v746 = vpack.c.b16 %v738, %v737
      %v747 = vpack.c.b16 %v740, %v739
      %v748 = vpack.c.b16 %v742, %v741
      %v749 = vpack.c.b16 %v744, %v743
      %v750 = vpack.c.b16 %v745, %v745
      %vm755 = vcmask 588800
      %v756 = vsel %vm755, %v713, 0
      %v758 = vsel %vm755, %v715, 0
      %v760 = vsel %vm755, %v717, 0
      %v762 = vsel %vm755, %v719, 0
      %v764 = vsel %vm755, %v721, 0
      %v766 = vsel %vm755, %v723, 0
      %v768 = vsel %vm755, %v725, 0
      %v770 = vsel %vm755, %v727, 0
      %vm772 = vcmask 1043456
      %v774 = vsel %vm772, %v750, 0
      %776 = vmatprep.subr.bf16.mxu0 0
      %777 = vmatpush1.bf16.msra.mxu0 %v746
      %778 = vmatprep.subr.bf16.mxu0 0
      %779 = vmatpush1.bf16.msra.mxu0 %v747
      %780 = vmatprep.subr.bf16.mxu0 0
      %781 = vmatpush1.bf16.msra.mxu0 %v748
      %782 = vmatprep.subr.bf16.mxu0 0
      %783 = vmatpush1.bf16.msra.mxu0 %v749
      %784 = vmatprep.subr.bf16.mxu0 0
      %785 = vmatpush1.bf16.msra.mxu0 %v774
      %786 = vmatprep.subr.bf16.mxu0 0
      %787 = vmatpush1.bf16.msra.mxu0 0
      %788 = vmatprep.subr.bf16.mxu0 0
      %789 = vmatpush1.bf16.msra.mxu0 0
      %790 = vmatprep.subr.bf16.mxu0 0
      %791 = vmatpush1.bf16.msra.mxu0 0
      %792 = vmatprep.subr.bf16.mxu0 0
      %793 = vmatpush1.bf16.msra.mxu0 0
      %794 = vmatprep.subr.bf16.mxu0 0
      %795 = vmatpush1.bf16.msra.mxu0 0
      %796 = vmatprep.subr.bf16.mxu0 0
      %797 = vmatpush1.bf16.msra.mxu0 0
      %798 = vmatprep.subr.bf16.mxu0 0
      %799 = vmatpush1.bf16.msra.mxu0 0
      %800 = vmatprep.subr.bf16.mxu0 0
      %801 = vmatpush1.bf16.msra.mxu0 0
      %802 = vmatprep.subr.bf16.mxu0 0
      %803 = vmatpush1.bf16.msra.mxu0 0
      %804 = vmatprep.subr.bf16.mxu0 0
      %805 = vmatpush1.bf16.msra.mxu0 0
      %806 = vmatprep.subr.bf16.mxu0 0
      %807 = vmatpush1.bf16.msra.mxu0 0
      %808 = vmatprep.mubr.bf16.mxu0 0
      %809 = vmatmul.mubr.bf16.gmra.mrb[0].mxu0 %v756
      %v810 = vpop.f32.mrb[0].mxu0
      %v811 = vadd.f32 0.0, %v810
      %v812 = vpop.f32.mrb[0].mxu0
      %v813 = vpop.f32.mrb[0].mxu0
      %v814 = vadd.f32 0.0, %v813
      %v815 = vpop.f32.mrb[0].mxu0
      %816 = vmatprep.mubr.bf16.mxu0 0
      %817 = vmatmul.mubr.bf16.gmra.mrb[0].mxu0 %v758
      %v818 = vpop.f32.mrb[0].mxu0
      %v819 = vadd.f32 0.0, %v818
      %v820 = vpop.f32.mrb[0].mxu0
      %v821 = vpop.f32.mrb[0].mxu0
      %v822 = vadd.f32 0.0, %v821
      %v823 = vpop.f32.mrb[0].mxu0
      %824 = vmatprep.mubr.bf16.mxu0 0
      %825 = vmatmul.mubr.bf16.gmra.mrb[0].mxu0 %v760
      %v826 = vpop.f32.mrb[0].mxu0
      %v827 = vadd.f32 0.0, %v826
      %v828 = vpop.f32.mrb[0].mxu0
      %v829 = vpop.f32.mrb[0].mxu0
      %v830 = vadd.f32 0.0, %v829
      %v831 = vpop.f32.mrb[0].mxu0
      %832 = vmatprep.mubr.bf16.mxu0 0
      %833 = vmatmul.mubr.bf16.gmra.mrb[0].mxu0 %v762
      %v834 = vpop.f32.mrb[0].mxu0
      %v835 = vadd.f32 0.0, %v834
      %v836 = vpop.f32.mrb[0].mxu0
      %v837 = vpop.f32.mrb[0].mxu0
      %v838 = vadd.f32 0.0, %v837
      %v839 = vpop.f32.mrb[0].mxu0
      %840 = vmatprep.mubr.bf16.mxu0 0
      %841 = vmatmul.mubr.bf16.gmra.mrb[0].mxu0 %v764
      %v842 = vpop.f32.mrb[0].mxu0
      %v843 = vadd.f32 0.0, %v842
      %v844 = vpop.f32.mrb[0].mxu0
      %v845 = vpop.f32.mrb[0].mxu0
      %v846 = vadd.f32 0.0, %v845
      %v847 = vpop.f32.mrb[0].mxu0
      %848 = vmatprep.mubr.bf16.mxu0 0
      %849 = vmatmul.mubr.bf16.gmra.mrb[0].mxu0 %v766
      %v850 = vpop.f32.mrb[0].mxu0
      %v851 = vadd.f32 0.0, %v850
      %v852 = vpop.f32.mrb[0].mxu0
      %v853 = vpop.f32.mrb[0].mxu0
      %v854 = vadd.f32 0.0, %v853
      %v855 = vpop.f32.mrb[0].mxu0
      %856 = vmatprep.mubr.bf16.mxu0 0
      %857 = vmatmul.mubr.bf16.gmra.mrb[0].mxu0 %v768
      %v858 = vpop.f32.mrb[0].mxu0
      %v859 = vadd.f32 0.0, %v858
      %v860 = vpop.f32.mrb[0].mxu0
      %v861 = vpop.f32.mrb[0].mxu0
      %v862 = vadd.f32 0.0, %v861
      %v863 = vpop.f32.mrb[0].mxu0
      %864 = vmatprep.mubr.bf16.mxu0 0
      %865 = vmatmul.mubr.bf16.gmra.mrb[0].mxu0 %v770
      %v866 = vpop.f32.mrb[0].mxu0
      %v867 = vadd.f32 0.0, %v866
      %v868 = vpop.f32.mrb[0].mxu0
      %v869 = vpop.f32.mrb[0].mxu0
      %v870 = vadd.f32 0.0, %v869
      %v871 = vpop.f32.mrb[0].mxu0
      %872 = vdwg.mxu0
      %873 = vst.msk [vmem:[%s215] sm:$0xff] %vm584, %v811
      %874 = vst.msk [vmem:[%s215 + $0x8] sm:$0xff] %vm584, %v814
      %875 = vst.msk [vmem:[%s215 + $0x10] sm:$0xff] %vm584, %v819
      %876 = vst.msk [vmem:[%s215 + $0x18] sm:$0xff] %vm584, %v822
      %877 = vst.msk [vmem:[%s215 + $0x20] sm:$0xff] %vm584, %v827
      %878 = vst.msk [vmem:[%s215 + $0x28] sm:$0xff] %vm584, %v830
      %879 = vst.msk [vmem:[%s215 + $0x30] sm:$0xff] %vm584, %v835
      %880 = vst.msk [vmem:[%s215 + $0x38] sm:$0xff] %vm584, %v838
      %881 = vst.msk [vmem:[%s215 + $0x40] sm:$0xff] %vm584, %v843
      %882 = vst.msk [vmem:[%s215 + $0x48] sm:$0xff] %vm584, %v846
      %883 = vst.msk [vmem:[%s215 + $0x50] sm:$0xff] %vm584, %v851
      %884 = vst.msk [vmem:[%s215 + $0x58] sm:$0xff] %vm584, %v854
      %885 = vst.msk [vmem:[%s215 + $0x60] sm:$0xff] %vm584, %v859
      %886 = vst.msk [vmem:[%s215 + $0x68] sm:$0xff] %vm584, %v862
      %887 = vst.msk [vmem:[%s215 + $0x70] sm:$0xff] %vm584, %v867
      %888 = vst.msk [vmem:[%s215 + $0x78] sm:$0xff] %vm584, %v870
      %v889 = vsel %vm584, %v811, 0.0
      %v890 = vsel %vm584, %v814, 0.0
      %v891 = vadd.f32 %v889, %v890
      %v892 = vsel %vm584, %v819, 0.0
      %v893 = vadd.f32 %v891, %v892
      %v894 = vsel %vm584, %v822, 0.0
      %v895 = vadd.f32 %v893, %v894
      %v896 = vsel %vm584, %v827, 0.0
      %v897 = vadd.f32 %v895, %v896
      %v898 = vsel %vm584, %v830, 0.0
      %v899 = vadd.f32 %v897, %v898
      %v900 = vsel %vm584, %v835, 0.0
      %v901 = vadd.f32 %v899, %v900
      %v902 = vsel %vm584, %v838, 0.0
      %v903 = vadd.f32 %v901, %v902
      %v904 = vsel %vm584, %v843, 0.0
      %v905 = vadd.f32 %v903, %v904
      %v906 = vsel %vm584, %v846, 0.0
      %v907 = vadd.f32 %v905, %v906
      %v908 = vsel %vm584, %v851, 0.0
      %v909 = vadd.f32 %v907, %v908
      %v910 = vsel %vm584, %v854, 0.0
      %v911 = vadd.f32 %v909, %v910
      %v912 = vsel %vm584, %v859, 0.0
      %v913 = vadd.f32 %v911, %v912
      %v914 = vsel %vm584, %v862, 0.0
      %v915 = vadd.f32 %v913, %v914
      %v916 = vsel %vm584, %v867, 0.0
      %v917 = vadd.f32 %v915, %v916
      %v918 = vsel %vm584, %v870, 0.0
      %v919 = vadd.f32 %v917, %v918
      %v920 = vrot.slane %v919, 4
      %v921 = vadd.f32 %v919, %v920
      %v922 = vrot.slane %v921, 2
      %v923 = vadd.f32 %v921, %v922
      %v924 = vrot.slane %v923, 1
      %v925 = vadd.f32 %v923, %v924
      %v926 = vmul.f32 %v811, %v811
      %v927 = vmul.f32 %v814, %v814
      %v928 = vmul.f32 %v819, %v819
      %v929 = vmul.f32 %v822, %v822
      %v930 = vmul.f32 %v827, %v827
      %v931 = vmul.f32 %v830, %v830
      %v932 = vmul.f32 %v835, %v835
      %v933 = vmul.f32 %v838, %v838
      %v934 = vmul.f32 %v843, %v843
      %v935 = vmul.f32 %v846, %v846
      %v936 = vmul.f32 %v851, %v851
      %v937 = vmul.f32 %v854, %v854
      %v938 = vmul.f32 %v859, %v859
      %v939 = vmul.f32 %v862, %v862
      %v940 = vmul.f32 %v867, %v867
      %v941 = vmul.f32 %v870, %v870
      %v942 = vsel %vm584, %v926, 0.0
      %v943 = vsel %vm584, %v927, 0.0
      %v944 = vadd.f32 %v942, %v943
      %v945 = vsel %vm584, %v928, 0.0
      %v946 = vadd.f32 %v944, %v945
      %v947 = vsel %vm584, %v929, 0.0
      %v948 = vadd.f32 %v946, %v947
      %v949 = vsel %vm584, %v930, 0.0
      %v950 = vadd.f32 %v948, %v949
      %v951 = vsel %vm584, %v931, 0.0
      %v952 = vadd.f32 %v950, %v951
      %v953 = vsel %vm584, %v932, 0.0
      %v954 = vadd.f32 %v952, %v953
      %v955 = vsel %vm584, %v933, 0.0
      %v956 = vadd.f32 %v954, %v955
      %v957 = vsel %vm584, %v934, 0.0
      %v958 = vadd.f32 %v956, %v957
      %v959 = vsel %vm584, %v935, 0.0
      %v960 = vadd.f32 %v958, %v959
      %v961 = vsel %vm584, %v936, 0.0
      %v962 = vadd.f32 %v960, %v961
      %v963 = vsel %vm584, %v937, 0.0
      %v964 = vadd.f32 %v962, %v963
      %v965 = vsel %vm584, %v938, 0.0
      %v966 = vadd.f32 %v964, %v965
      %v967 = vsel %vm584, %v939, 0.0
      %v968 = vadd.f32 %v966, %v967
      %v969 = vsel %vm584, %v940, 0.0
      %v970 = vadd.f32 %v968, %v969
      %v971 = vsel %vm584, %v941, 0.0
      %v972 = vadd.f32 %v970, %v971
      %v973 = vrot.slane %v972, 4
      %v974 = vadd.f32 %v972, %v973
      %v975 = vrot.slane %v974, 2
      %v976 = vadd.f32 %v974, %v975
      %v977 = vrot.slane %v976, 1
      %v978 = vadd.f32 %v976, %v977
      %vm979 = vcmask 1040384
      %v980 = vsel %vm979, %v925, %v978
      %p981 = scmp.eq.s32.totalorder %s20, 0
      // Predicated region
      $region29: #{_lambda_.3} parent=27 // pred_check
        %p982 = pneg %p981
      $region30: #{_lambda_.3} parent=27 // pred_check_branch
        %984 = sbr.rel (%p982) target = $region32
      $region31: #{_lambda_.3} parent=27 // pred_region
        %vm985 = vcmask 58368
        %986 = vst.msk [vmem:[#allocation2] sm:$0x3] %vm985, 0.0
      $region32: #{_lambda_.3} parent=27 // pred_fallthru
        _
      %v987 = vld [vmem:[#allocation2] sm:$0x3]
      %v988 = vadd.f32 %v987, %v980
      %vm989 = vcmask 58368
      %990 = vst.msk [vmem:[#allocation2] sm:$0x3] %vm989, %v988
      %p991 = scmp.eq.s32.totalorder %s20, 1
      // Predicated region
      $region33: #{_lambda_.3} parent=27 // pred_check
        %p992 = pneg %p991
      $region34: #{_lambda_.3} parent=27 // pred_check_branch
        %994 = sbr.rel (%p992) target = $region36
      $region35: #{_lambda_.3} parent=27 // pred_region
        %v995 = vld [vmem:[#allocation2] sm:$0x3]
        %996 = vst.msk [vmem:[%s220] sm:$0x3] %vm989, %v995
      $region36: #{_lambda_.3} parent=27 // pred_fallthru
        _
      %s997 = smul.u32 8, %s20
      %p998 = scmp.lt.s32.totalorder %s19, 1
      %s999 = scalar_select %p998, %s19, 1
      %p1000 = scmp.lt.s32.totalorder %s997, 15
      %s1001 = scalar_select %p1000, %s997, 15
      %s1002 = smul.addr %s1001, 2
      %s1003 = smul.addr %s999, 32
      %s1004 = sadd.s32 %s1002, %s1003
      %s1005 = smul.addr %s1004, 8
      %s1006 = scalar_lea.vmem %s2, %s1005
      %p1007 = scmp.lt.s32.totalorder %s19, 1
      %s1008 = scalar_select %p1007, %s19, 1
      %s1009 = smul.addr %s1008, 2
      %s1010 = scalar_lea.vmem %s3, %s1009
      // Predicated region
      $region37: #{_lambda_.3} parent=27 // pred_check
        %p1011 = pneg %p98
      $region38: #{_lambda_.3} parent=27 // pred_check_branch
        %1013 = sbr.rel (%p1011) target = $region40
      $region39: #{_lambda_.3} parent=27 // pred_region
        %s1014 = smul.u32 8, %s20
      $region40: #{_lambda_.3} parent=27 // pred_fallthru
        _
      // Predicated region
      $region41: #{_lambda_.3} parent=27 // pred_check
        %p1015 = pneg %p124
      $region42: #{_lambda_.3} parent=27 // pred_check_branch
        %1017 = sbr.rel (%p1015) target = $region44
      $region43: #{_lambda_.3} parent=27 // pred_region
        _
      $region44: #{_lambda_.3} parent=27 // pred_fallthru
        _
    $region28: #{_lambda_.3} parent=5 // pred_fallthru
      _
    %p1018 = scmp.le.s32.totalorder 2, %s10
    // Predicated region
    $region45: #{_lambda_.3} parent=5 // pred_check
      %p1019 = pneg %p1018
    $region46: #{_lambda_.3} parent=5 // pred_check_branch
      %1021 = sbr.rel (%p1019) target = $region48
    $region47: #{_lambda_.3} parent=5 // pred_region
      %s1022 = ssub.s32 %s10, 2
      // Predicated region
      $region49: #{_lambda_.3} parent=47 // pred_check
        %p1023 = pneg %p104
      $region50: #{_lambda_.3} parent=47 // pred_check_branch
        %1025 = sbr.rel (%p1023) target = $region52
      $region51: #{_lambda_.3} parent=47 // pred_region
        %s1026 = smul.u32 8, %s22
        %p1027 = scmp.lt.s32.totalorder %s21, 1
        %s1028 = scalar_select %p1027, %s21, 1
        %p1029 = scmp.lt.s32.totalorder %s1026, 15
        %s1030 = scalar_select %p1029, %s1026, 15
        %s1031 = smul.addr %s1030, 2
        %s1032 = smul.addr %s1028, 32
        %s1033 = sadd.s32 %s1031, %s1032
        %s1034 = smul.addr %s1033, 8
        %s1035 = scalar_lea.vmem %s2, %s1034
      $region52: #{_lambda_.3} parent=47 // pred_fallthru
        _
      // Predicated region
      $region53: #{_lambda_.3} parent=47 // pred_check
        %p1036 = pneg %p130
      $region54: #{_lambda_.3} parent=47 // pred_check_branch
        %1038 = sbr.rel (%p1036) target = $region56
      $region55: #{_lambda_.3} parent=47 // pred_region
        %p1039 = scmp.lt.s32.totalorder %s21, 1
        %s1040 = scalar_select %p1039, %s21, 1
        %s1041 = smul.addr %s1040, 2
        %s1042 = scalar_lea.vmem %s3, %s1041
      $region56: #{_lambda_.3} parent=47 // pred_fallthru
        _
    $region48: #{_lambda_.3} parent=5 // pred_fallthru
      _
  $region6: #{_lambda_.3} parent=0 // loop_footer
    %s14 = sadd.s32 1, %s10
  $region7: #{_lambda_.3} parent=0 // loop_footer_branch
    %9 = sbr.rel target = $region3
  $region8: #{_lambda_.3} parent=0 // loop_exit
    _

// kernel: _lambda_.4
$region0: #{_lambda_.4}
  #allocation0 [shape = 'u32[]', space=smem, size = 0x4, offset = 0x4, fixed_abs, tag = 'smem constant byte address 0x4 - core index']
  #allocation1 [shape = 'u32[144,128]{1,0:T(1,128)}', space=vmem, size = 0x12000, scoped, tag = 'internal scratch']
  #allocation2 [shape = 'f32[2,8]{1,0:T(2,128)}', space=vmem, size = 0x400, scoped, tag = 'scratch operand']
  %s0 = inlined_call_operand.vmem [shape: f32[4,10,16,8], index: 0, kind: input, shape index: {}]
  %s1 = inlined_call_operand.vmem [shape: f32[1,8], index: 1, kind: input, shape index: {}]
  %s2 = inlined_call_operand.vmem [shape: f32[1,8], index: 2, kind: input, shape index: {}]
  %s3 = inlined_call_operand.vmem [shape: bf16[72,8], index: 3, kind: input, shape index: {}]
  %s4 = inlined_call_operand.vmem [shape: f32[2,16,16,8], index: 4, kind: output, shape index: {0}]
  %s5 = inlined_call_operand.vmem [shape: f32[2,2,8], index: 5, kind: output, shape index: {1}]
  %6 = xla_tuple %s4, %s5
  %s7 = sld [smem:[#allocation0]]
  $region65: #{_lambda_.4} parent=0
    _
  %s9 = ssub.s32 1, %s7
  %s10 = scalar_select 0, %s9, %s7
  loop: start=0, step=1, limit=6
  $region2: #{_lambda_.4} parent=0 // loop_pre_header
    _
  $region3: #{_lambda_.4} parent=0 // loop_header
    %s12 = sphi 0, %s16
    %p13 = scmp.ge.s32.totalorder %s12, 6
    %s19 = sphi 0, %s31
    %s20 = sphi 0, %s27
    %s21 = sphi 0, %s19
    %s22 = sphi 0, %s20
    %s23 = sphi 0, %s21
    %s24 = sphi 0, %s22
    %s38 = sphi 0, %s40
    %s41 = sphi 0, %s38
    %s42 = sphi 0, %s41
    %s58 = sphi 0, %s42
    %s62 = sphi 0, %s62
    %s64 = sphi 0, %s62
    %s65 = sphi 0, %s64
    %s79 = sphi 0, %s65
    %s83 = sphi 0, %s83
    %s85 = sphi 0, %s83
    %s86 = sphi 0, %s85
    %s100 = sphi 0, %s86
    %s104 = sphi 0, %s104
    %s106 = sphi 0, %s104
    %s107 = sphi 0, %s106
    %s121 = sphi 0, %s107
    %s129 = sphi 0, %s131
    %s132 = sphi 0, %s129
    %s133 = sphi 0, %s132
    %s149 = sphi 0, %s133
    %s155 = sphi 0, %s157
    %s158 = sphi 0, %s155
    %s159 = sphi 0, %s158
    %s175 = sphi 0, %s159
  $region4: #{_lambda_.4} parent=0 // loop_header_branch
    %15 = sbr.rel (%p13) target = $region8
  $region5: #{_lambda_.4} parent=0 // loop_body
    %s17 = ssub.s32 %s12, 1
    %s18 = ssub.s32 %s12, 2
    %s25 = sadd.s32 1, %s20
    %p26 = scmp.ge.s32.totalorder %s25, 2
    %s27 = scalar_select %p26, 0, %s25
    %s28 = sadd.s32 1, %s19
    %s29 = scalar_select %p26, %s28, %s19
    %p30 = scmp.ge.s32.totalorder %s29, 2
    %s31 = scalar_select %p30, 0, %s29
    %s32 = smul.u32 %s19, 2
    %s33 = sadd.s32 %s32, %s20
    %s34 = smul.u32 %s31, 2
    %s35 = sadd.s32 %s34, %s27
    %s36 = ssub.s32 %s33, %s35
    %p37 = scmp.eq.s32.totalorder %s36, 0
    %s39 = sadd.s32 %s38, 1
    %s40 = scalar_select %p37, %s38, %s39
    %p43 = pneg %p37
    %p44 = scmp.eq.s32.totalorder %s12, 3
    %p45 = por %p43, %p44
    %p46 = scmp.ne.s32.totalorder %s38, %s41
    %p47 = scmp.eq.s32.totalorder %s12, 0
    %p48 = por %p46, %p47
    %p49 = scmp.ne.s32.totalorder %s38, %s41
    %p50 = scmp.eq.s32.totalorder %s17, 3
    %p51 = por %p49, %p50
    %p52 = scmp.ne.s32.totalorder %s41, %s42
    %p53 = scmp.eq.s32.totalorder %s17, 0
    %p54 = por %p52, %p53
    %p55 = scmp.ne.s32.totalorder %s41, %s42
    %p56 = scmp.eq.s32.totalorder %s18, 3
    %p57 = por %p55, %p56
    %p59 = scmp.ne.s32.totalorder %s42, %s58
    %p60 = scmp.eq.s32.totalorder %s18, 0
    %p61 = por %p59, %p60
    %s63 = sadd.s32 %s62, 1
    %p66 = scmp.eq.s32.totalorder %s12, 3
    %p67 = scmp.ne.s32.totalorder %s62, %s64
    %p68 = scmp.eq.s32.totalorder %s12, 0
    %p69 = por %p67, %p68
    %p70 = scmp.ne.s32.totalorder %s62, %s64
    %p71 = scmp.eq.s32.totalorder %s17, 3
    %p72 = por %p70, %p71
    %p73 = scmp.ne.s32.totalorder %s64, %s65
    %p74 = scmp.eq.s32.totalorder %s17, 0
    %p75 = por %p73, %p74
    %p76 = scmp.ne.s32.totalorder %s64, %s65
    %p77 = scmp.eq.s32.totalorder %s18, 3
    %p78 = por %p76, %p77
    %p80 = scmp.ne.s32.totalorder %s65, %s79
    %p81 = scmp.eq.s32.totalorder %s18, 0
    %p82 = por %p80, %p81
    %s84 = sadd.s32 %s83, 1
    %p87 = scmp.eq.s32.totalorder %s12, 3
    %p88 = scmp.ne.s32.totalorder %s83, %s85
    %p89 = scmp.eq.s32.totalorder %s12, 0
    %p90 = por %p88, %p89
    %p91 = scmp.ne.s32.totalorder %s83, %s85
    %p92 = scmp.eq.s32.totalorder %s17, 3
    %p93 = por %p91, %p92
    %p94 = scmp.ne.s32.totalorder %s85, %s86
    %p95 = scmp.eq.s32.totalorder %s17, 0
    %p96 = por %p94, %p95
    %p97 = scmp.ne.s32.totalorder %s85, %s86
    %p98 = scmp.eq.s32.totalorder %s18, 3
    %p99 = por %p97, %p98
    %p101 = scmp.ne.s32.totalorder %s86, %s100
    %p102 = scmp.eq.s32.totalorder %s18, 0
    %p103 = por %p101, %p102
    %s105 = sadd.s32 %s104, 1
    %p108 = scmp.eq.s32.totalorder %s12, 3
    %p109 = scmp.ne.s32.totalorder %s104, %s106
    %p110 = scmp.eq.s32.totalorder %s12, 0
    %p111 = por %p109, %p110
    %p112 = scmp.ne.s32.totalorder %s104, %s106
    %p113 = scmp.eq.s32.totalorder %s17, 3
    %p114 = por %p112, %p113
    %p115 = scmp.ne.s32.totalorder %s106, %s107
    %p116 = scmp.eq.s32.totalorder %s17, 0
    %p117 = por %p115, %p116
    %p118 = scmp.ne.s32.totalorder %s106, %s107
    %p119 = scmp.eq.s32.totalorder %s18, 3
    %p120 = por %p118, %p119
    %p122 = scmp.ne.s32.totalorder %s107, %s121
    %p123 = scmp.eq.s32.totalorder %s18, 0
    %p124 = por %p122, %p123
    %s125 = ssub.s32 %s19, %s31
    %s126 = ssub.s32 %s20, %s27
    %s127 = sor.u32 %s125, %s126
    %p128 = scmp.eq.s32.totalorder %s127, 0
    %s130 = sadd.s32 %s129, 1
    %s131 = scalar_select %p128, %s129, %s130
    %p134 = pneg %p128
    %p135 = scmp.eq.s32.totalorder %s12, 3
    %p136 = por %p134, %p135
    %p137 = scmp.ne.s32.totalorder %s129, %s132
    %p138 = scmp.eq.s32.totalorder %s12, 0
    %p139 = por %p137, %p138
    %p140 = scmp.ne.s32.totalorder %s129, %s132
    %p141 = scmp.eq.s32.totalorder %s17, 3
    %p142 = por %p140, %p141
    %p143 = scmp.ne.s32.totalorder %s132, %s133
    %p144 = scmp.eq.s32.totalorder %s17, 0
    %p145 = por %p143, %p144
    %p146 = scmp.ne.s32.totalorder %s132, %s133
    %p147 = scmp.eq.s32.totalorder %s18, 3
    %p148 = por %p146, %p147
    %p150 = scmp.ne.s32.totalorder %s133, %s149
    %p151 = scmp.eq.s32.totalorder %s18, 0
    %p152 = por %p150, %p151
    %s153 = ssub.s32 %s19, %s31
    %p154 = scmp.eq.s32.totalorder %s153, 0
    %s156 = sadd.s32 %s155, 1
    %s157 = scalar_select %p154, %s155, %s156
    %p160 = pneg %p154
    %p161 = scmp.eq.s32.totalorder %s12, 3
    %p162 = por %p160, %p161
    %p163 = scmp.ne.s32.totalorder %s155, %s158
    %p164 = scmp.eq.s32.totalorder %s12, 0
    %p165 = por %p163, %p164
    %p166 = scmp.ne.s32.totalorder %s155, %s158
    %p167 = scmp.eq.s32.totalorder %s17, 3
    %p168 = por %p166, %p167
    %p169 = scmp.ne.s32.totalorder %s158, %s159
    %p170 = scmp.eq.s32.totalorder %s17, 0
    %p171 = por %p169, %p170
    %p172 = scmp.ne.s32.totalorder %s158, %s159
    %p173 = scmp.eq.s32.totalorder %s18, 3
    %p174 = por %p172, %p173
    %p176 = scmp.ne.s32.totalorder %s159, %s175
    %p177 = scmp.eq.s32.totalorder %s18, 0
    %p178 = por %p176, %p177
    %p179 = scmp.le.s32.totalorder 1, %s12
    %p180 = scmp.lt.s32.totalorder %s12, 5
    %p181 = pnand %p179, %p180
    %p182 = pneg %p181
    // Predicated region
    $region9: #{_lambda_.4} parent=5 // pred_check
      _
    $region10: #{_lambda_.4} parent=5 // pred_check_branch
      %184 = sbr.rel (%p181) target = $region12
    $region11: #{_lambda_.4} parent=5 // pred_region
      %s185 = ssub.s32 %s12, 1
      // Predicated region
      $region13: #{_lambda_.4} parent=11 // pred_check
        %p186 = pneg %p75
      $region14: #{_lambda_.4} parent=11 // pred_check_branch
        %188 = sbr.rel (%p186) target = $region16
      $region15: #{_lambda_.4} parent=11 // pred_region
        _
      $region16: #{_lambda_.4} parent=11 // pred_fallthru
        _
      // Predicated region
      $region17: #{_lambda_.4} parent=11 // pred_check
        %p189 = pneg %p96
      $region18: #{_lambda_.4} parent=11 // pred_check_branch
        %191 = sbr.rel (%p189) target = $region20
      $region19: #{_lambda_.4} parent=11 // pred_region
        _
      $region20: #{_lambda_.4} parent=11 // pred_fallthru
        _
      // Predicated region
      $region21: #{_lambda_.4} parent=11 // pred_check
        %p192 = pneg %p117
      $region22: #{_lambda_.4} parent=11 // pred_check_branch
        %194 = sbr.rel (%p192) target = $region24
      $region23: #{_lambda_.4} parent=11 // pred_region
        _
      $region24: #{_lambda_.4} parent=11 // pred_fallthru
        _
    $region12: #{_lambda_.4} parent=5 // pred_fallthru
      _
    %p195 = scmp.lt.s32.totalorder %s12, 4
    // Predicated region
    $region25: #{_lambda_.4} parent=5 // pred_check
      %p196 = pneg %p195
    $region26: #{_lambda_.4} parent=5 // pred_check_branch
      %198 = sbr.rel (%p196) target = $region28
    $region27: #{_lambda_.4} parent=5 // pred_region
      // Predicated region
      $region29: #{_lambda_.4} parent=27 // pred_check
        %p199 = pneg %p48
      $region30: #{_lambda_.4} parent=27 // pred_check_branch
        %201 = sbr.rel (%p199) target = $region32
      $region31: #{_lambda_.4} parent=27 // pred_region
        %s202 = smul.u32 %s19, 2
        %s203 = sadd.s32 %s202, %s20
        %p204 = scmp.lt.s32.totalorder %s203, 3
        %s205 = scalar_select %p204, %s203, 3
        %s206 = smul.addr %s205, 20
        %s207 = smul.addr %s206, 8
        %s208 = scalar_lea.vmem %s0, %s207
        %s209 = smul.u32 %s19, 2
        %s210 = sadd.s32 %s209, %s20
      $region32: #{_lambda_.4} parent=27 // pred_fallthru
        _
    $region28: #{_lambda_.4} parent=5 // pred_fallthru
      _
    %p211 = scmp.le.s32.totalorder 1, %s12
    %p212 = scmp.lt.s32.totalorder %s12, 5
    %p213 = pnand %p211, %p212
    %p214 = pneg %p213
    // Predicated region
    $region33: #{_lambda_.4} parent=5 // pred_check
      _
    $region34: #{_lambda_.4} parent=5 // pred_check_branch
      %216 = sbr.rel (%p213) target = $region36
    $region35: #{_lambda_.4} parent=5 // pred_region
      %s217 = ssub.s32 %s12, 1
      %s218 = smul.u32 %s21, 2
      %s219 = sadd.s32 %s218, %s22
      %p220 = scmp.lt.s32.totalorder %s219, 3
      %s221 = scalar_select %p220, %s219, 3
      %s222 = smul.addr %s221, 20
      %s223 = smul.addr %s222, 8
      %s224 = scalar_lea.vmem %s0, %s223
      %p225 = pneg %p54
      %p226 = pneg %p51
      %p227 = pneg %p75
      %p228 = pneg %p72
      %p229 = pneg %p96
      %p230 = pneg %p93
      %p231 = pneg %p117
      %p232 = pneg %p114
      %p233 = pneg %p145
      %p234 = pneg %p142
      %s235 = smul.u32 8, %s22
      %p236 = scmp.lt.s32.totalorder %s21, 1
      %s237 = scalar_select %p236, %s21, 1
      %p238 = scmp.lt.s32.totalorder %s235, 15
      %s239 = scalar_select %p238, %s235, 15
      %s240 = smul.addr %s239, 2
      %s241 = smul.addr %s237, 32
      %s242 = sadd.s32 %s240, %s241
      %s243 = smul.addr %s242, 8
      %s244 = scalar_lea.vmem %s4, %s243
      %p245 = pneg %p171
      %p246 = pneg %p168
      %p247 = scmp.lt.s32.totalorder %s21, 1
      %s248 = scalar_select %p247, %s21, 1
      %s249 = smul.addr %s248, 2
      %s250 = scalar_lea.vmem %s5, %s249
      %s251 = smul.u32 %s21, 2
      %s252 = sadd.s32 %s251, %s22
      %p253 = scmp.lt.s32.totalorder %s252, 3
      %s254 = scalar_select %p253, %s252, 3
      %s255 = smul.addr %s254, 20
      %s256 = smul.addr %s255, 8
      %s257 = scalar_lea.vmem %s0, %s256
      %s258 = smul.u32 %s21, 2
      %s259 = sadd.s32 %s258, %s22
      %s260 = smul.u32 8, %s22
      %p261 = scmp.lt.s32.totalorder %s21, 1
      %s262 = scalar_select %p261, %s21, 1
      %p263 = scmp.lt.s32.totalorder %s260, 15
      %s264 = scalar_select %p263, %s260, 15
      %s265 = smul.addr %s264, 2
      %s266 = smul.addr %s262, 32
      %s267 = sadd.s32 %s265, %s266
      %s268 = smul.addr %s267, 8
      %s269 = scalar_lea.vmem %s4, %s268
      %s270 = smul.u32 8, %s22
      %p271 = scmp.lt.s32.totalorder %s21, 1
      %s272 = scalar_select %p271, %s21, 1
      %s273 = smul.addr %s272, 2
      %s274 = scalar_lea.vmem %s5, %s273
      %v276 = vld [vmem:[%s257] sm:$0xff]
      %v277 = vld [vmem:[%s257 + $0x8] sm:$0xff]
      %v278 = vld [vmem:[%s257 + $0x10] sm:$0xff]
      %v279 = vld [vmem:[%s257 + $0x18] sm:$0xff]
      %v280 = vld [vmem:[%s257 + $0x20] sm:$0xff]
      %v281 = vld [vmem:[%s257 + $0x28] sm:$0xff]
      %v282 = vld [vmem:[%s257 + $0x30] sm:$0xff]
      %v283 = vld [vmem:[%s257 + $0x38] sm:$0xff]
      %v284 = vld [vmem:[%s257 + $0x40] sm:$0xff]
      %v285 = vld [vmem:[%s257 + $0x48] sm:$0xff]
      %v286 = vld [vmem:[%s257 + $0x50] sm:$0xff]
      %v287 = vld [vmem:[%s257 + $0x58] sm:$0xff]
      %v288 = vld [vmem:[%s257 + $0x60] sm:$0xff]
      %v289 = vld [vmem:[%s257 + $0x68] sm:$0xff]
      %v290 = vld [vmem:[%s257 + $0x70] sm:$0xff]
      %v291 = vld [vmem:[%s257 + $0x78] sm:$0xff]
      %v292 = vld [vmem:[%s257 + $0x80] sm:$0xff]
      %v293 = vld [vmem:[%s257 + $0x88] sm:$0xff]
      %v294 = vld [vmem:[%s257 + $0x90] sm:$0xff]
      %v295 = vld [vmem:[%s257 + $0x98] sm:$0xff]
      %v296 = vld [vmem:[%s1] sm:$0x1]
      %v298 = vlaneseq
      %v299 = vshrl.u32 %v298, 7
      %v300 = vsub.s32 0, %v299
      %v301 = vrot.slane %v296, %v300
      %v303 = vmul.f32 %v276, %v301
      %v304 = vmul.f32 %v277, %v301
      %v305 = vmul.f32 %v278, %v301
      %v306 = vmul.f32 %v279, %v301
      %v307 = vmul.f32 %v280, %v301
      %v308 = vmul.f32 %v281, %v301
      %v309 = vmul.f32 %v282, %v301
      %v310 = vmul.f32 %v283, %v301
      %v311 = vmul.f32 %v284, %v301
      %v312 = vmul.f32 %v285, %v301
      %v313 = vmul.f32 %v286, %v301
      %v314 = vmul.f32 %v287, %v301
      %v315 = vmul.f32 %v288, %v301
      %v316 = vmul.f32 %v289, %v301
      %v317 = vmul.f32 %v290, %v301
      %v318 = vmul.f32 %v291, %v301
      %v319 = vmul.f32 %v292, %v301
      %v320 = vmul.f32 %v293, %v301
      %v321 = vmul.f32 %v294, %v301
      %v322 = vmul.f32 %v295, %v301
      %v323 = vld [vmem:[%s2] sm:$0x1]
      %v325 = vlaneseq
      %v326 = vshrl.u32 %v325, 7
      %v327 = vsub.s32 0, %v326
      %v328 = vrot.slane %v323, %v327
      %v330 = vadd.f32 %v303, %v328
      %v331 = vadd.f32 %v304, %v328
      %v332 = vadd.f32 %v305, %v328
      %v333 = vadd.f32 %v306, %v328
      %v334 = vadd.f32 %v307, %v328
      %v335 = vadd.f32 %v308, %v328
      %v336 = vadd.f32 %v309, %v328
      %v337 = vadd.f32 %v310, %v328
      %v338 = vadd.f32 %v311, %v328
      %v339 = vadd.f32 %v312, %v328
      %v340 = vadd.f32 %v313, %v328
      %v341 = vadd.f32 %v314, %v328
      %v342 = vadd.f32 %v315, %v328
      %v343 = vadd.f32 %v316, %v328
      %v344 = vadd.f32 %v317, %v328
      %v345 = vadd.f32 %v318, %v328
      %v346 = vadd.f32 %v319, %v328
      %v347 = vadd.f32 %v320, %v328
      %v348 = vadd.f32 %v321, %v328
      %v349 = vadd.f32 %v322, %v328
      %v350 = vxor.u32 %v330, 2147483648
      %v351 = vxor.u32 %v331, 2147483648
      %v352 = vxor.u32 %v332, 2147483648
      %v353 = vxor.u32 %v333, 2147483648
      %v354 = vxor.u32 %v334, 2147483648
      %v355 = vxor.u32 %v335, 2147483648
      %v356 = vxor.u32 %v336, 2147483648
      %v357 = vxor.u32 %v337, 2147483648
      %v358 = vxor.u32 %v338, 2147483648
      %v359 = vxor.u32 %v339, 2147483648
      %v360 = vxor.u32 %v340, 2147483648
      %v361 = vxor.u32 %v341, 2147483648
      %v362 = vxor.u32 %v342, 2147483648
      %v363 = vxor.u32 %v343, 2147483648
      %v364 = vxor.u32 %v344, 2147483648
      %v365 = vxor.u32 %v345, 2147483648
      %v366 = vxor.u32 %v346, 2147483648
      %v367 = vxor.u32 %v347, 2147483648
      %v368 = vxor.u32 %v348, 2147483648
      %v369 = vxor.u32 %v349, 2147483648
      %v370 = vmul.f32 %v350, 1.442695
      %v371 = vpow.pop %v370
      %v372 = vmul.f32 %v351, 1.442695
      %v373 = vpow.pop %v372
      %v374 = vmul.f32 %v352, 1.442695
      %v375 = vpow.pop %v374
      %v376 = vmul.f32 %v353, 1.442695
      %v377 = vpow.pop %v376
      %v378 = vmul.f32 %v354, 1.442695
      %v379 = vpow.pop %v378
      %v380 = vmul.f32 %v355, 1.442695
      %v381 = vpow.pop %v380
      %v382 = vmul.f32 %v356, 1.442695
      %v383 = vpow.pop %v382
      %v384 = vmul.f32 %v357, 1.442695
      %v385 = vpow.pop %v384
      %v386 = vmul.f32 %v358, 1.442695
      %v387 = vpow.pop %v386
      %v388 = vmul.f32 %v359, 1.442695
      %v389 = vpow.pop %v388
      %v390 = vmul.f32 %v360, 1.442695
      %v391 = vpow.pop %v390
      %v392 = vmul.f32 %v361, 1.442695
      %v393 = vpow.pop %v392
      %v394 = vmul.f32 %v362, 1.442695
      %v395 = vpow.pop %v394
      %v396 = vmul.f32 %v363, 1.442695
      %v397 = vpow.pop %v396
      %v398 = vmul.f32 %v364, 1.442695
      %v399 = vpow.pop %v398
      %v400 = vmul.f32 %v365, 1.442695
      %v401 = vpow.pop %v400
      %v402 = vmul.f32 %v366, 1.442695
      %v403 = vpow.pop %v402
      %v404 = vmul.f32 %v367, 1.442695
      %v405 = vpow.pop %v404
      %v406 = vmul.f32 %v368, 1.442695
      %v407 = vpow.pop %v406
      %v408 = vmul.f32 %v369, 1.442695
      %v409 = vpow.pop %v408
      %v410 = vadd.f32 %v371, 1.0
      %v411 = vadd.f32 %v373, 1.0
      %v412 = vadd.f32 %v375, 1.0
      %v413 = vadd.f32 %v377, 1.0
      %v414 = vadd.f32 %v379, 1.0
      %v415 = vadd.f32 %v381, 1.0
      %v416 = vadd.f32 %v383, 1.0
      %v417 = vadd.f32 %v385, 1.0
      %v418 = vadd.f32 %v387, 1.0
      %v419 = vadd.f32 %v389, 1.0
      %v420 = vadd.f32 %v391, 1.0
      %v421 = vadd.f32 %v393, 1.0
      %v422 = vadd.f32 %v395, 1.0
      %v423 = vadd.f32 %v397, 1.0
      %v424 = vadd.f32 %v399, 1.0
      %v425 = vadd.f32 %v401, 1.0
      %v426 = vadd.f32 %v403, 1.0
      %v427 = vadd.f32 %v405, 1.0
      %v428 = vadd.f32 %v407, 1.0
      %v429 = vadd.f32 %v409, 1.0
      %v430 = vrcp.pop %v410
      %v431 = vmul.f32 1.0, %v430
      %v432 = vrcp.pop %v411
      %v433 = vmul.f32 1.0, %v432
      %v434 = vrcp.pop %v412
      %v435 = vmul.f32 1.0, %v434
      %v436 = vrcp.pop %v413
      %v437 = vmul.f32 1.0, %v436
      %v438 = vrcp.pop %v414
      %v439 = vmul.f32 1.0, %v438
      %v440 = vrcp.pop %v415
      %v441 = vmul.f32 1.0, %v440
      %v442 = vrcp.pop %v416
      %v443 = vmul.f32 1.0, %v442
      %v444 = vrcp.pop %v417
      %v445 = vmul.f32 1.0, %v444
      %v446 = vrcp.pop %v418
      %v447 = vmul.f32 1.0, %v446
      %v448 = vrcp.pop %v419
      %v449 = vmul.f32 1.0, %v448
      %v450 = vrcp.pop %v420
      %v451 = vmul.f32 1.0, %v450
      %v452 = vrcp.pop %v421
      %v453 = vmul.f32 1.0, %v452
      %v454 = vrcp.pop %v422
      %v455 = vmul.f32 1.0, %v454
      %v456 = vrcp.pop %v423
      %v457 = vmul.f32 1.0, %v456
      %v458 = vrcp.pop %v424
      %v459 = vmul.f32 1.0, %v458
      %v460 = vrcp.pop %v425
      %v461 = vmul.f32 1.0, %v460
      %v462 = vrcp.pop %v426
      %v463 = vmul.f32 1.0, %v462
      %v464 = vrcp.pop %v427
      %v465 = vmul.f32 1.0, %v464
      %v466 = vrcp.pop %v428
      %v467 = vmul.f32 1.0, %v466
      %v468 = vrcp.pop %v429
      %v469 = vmul.f32 1.0, %v468
      %v470 = vmul.f32 %v330, %v431
      %v471 = vmul.f32 %v331, %v433
      %v472 = vmul.f32 %v332, %v435
      %v473 = vmul.f32 %v333, %v437
      %v474 = vmul.f32 %v334, %v439
      %v475 = vmul.f32 %v335, %v441
      %v476 = vmul.f32 %v336, %v443
      %v477 = vmul.f32 %v337, %v445
      %v478 = vmul.f32 %v338, %v447
      %v479 = vmul.f32 %v339, %v449
      %v480 = vmul.f32 %v340, %v451
      %v481 = vmul.f32 %v341, %v453
      %v482 = vmul.f32 %v342, %v455
      %v483 = vmul.f32 %v343, %v457
      %v484 = vmul.f32 %v344, %v459
      %v485 = vmul.f32 %v345, %v461
      %v486 = vmul.f32 %v346, %v463
      %v487 = vmul.f32 %v347, %v465
      %v488 = vmul.f32 %v348, %v467
      %v489 = vmul.f32 %v349, %v469
      %p490 = scmp.ne.s32.totalorder %s22, 0
      %s491 = scalar_select %p490, 1, 0
      %v492 = vstv %s491
      %vm493 = vcmp.eq.s32.totalorder %v492, 1
      %p494 = scmp.ne.s32.totalorder %s22, 1
      %s495 = scalar_select %p494, 1, 0
      %v496 = vstv %s495
      %vm497 = vcmp.eq.s32.totalorder %v496, 1
      %v498 = vsel %vm493, 1, 0
      %v499 = vsel %vm497, 1, 0
      %vm500 = vcmp.eq.s32.totalorder %v498, 1
      %vm501 = vcmp.eq.s32.totalorder %v499, 1
      %v502 = vsel %vm500, %v470, 0.0
      %v503 = vsel %vm500, %v471, 0.0
      %v504 = vsel 1, %v472, 0.0
      %v505 = vsel 1, %v473, 0.0
      %v506 = vsel 1, %v474, 0.0
      %v507 = vsel 1, %v475, 0.0
      %v508 = vsel 1, %v476, 0.0
      %v509 = vsel 1, %v477, 0.0
      %v510 = vsel 1, %v478, 0.0
      %v511 = vsel 1, %v479, 0.0
      %v512 = vsel 1, %v480, 0.0
      %v513 = vsel 1, %v481, 0.0
      %v514 = vsel 1, %v482, 0.0
      %v515 = vsel 1, %v483, 0.0
      %v516 = vsel 1, %v484, 0.0
      %v517 = vsel 1, %v485, 0.0
      %v518 = vsel 1, %v486, 0.0
      %v519 = vsel 1, %v487, 0.0
      %v520 = vsel %vm501, %v488, 0.0
      %v521 = vsel %vm501, %v489, 0.0
      %v522 = vpack.c.bf16 %v503, %v502
      %v523 = vpack.c.bf16 %v505, %v504
      %v524 = vpack.c.bf16 %v507, %v506
      %v525 = vpack.c.bf16 %v509, %v508
      %v526 = vpack.c.bf16 %v511, %v510
      %v527 = vpack.c.bf16 %v513, %v512
      %v528 = vpack.c.bf16 %v515, %v514
      %v529 = vpack.c.bf16 %v517, %v516
      %v530 = vpack.c.bf16 %v519, %v518
      %v531 = vpack.c.bf16 %v521, %v520
      %v532 = vld [vmem:[%s3] sm:$0xf]
      %v533 = vld [vmem:[%s3 + $0x4] sm:$0xf]
      %v534 = vld [vmem:[%s3 + $0x8] sm:$0xf]
      %v535 = vld [vmem:[%s3 + $0xc] sm:$0xf]
      %v536 = vld [vmem:[%s3 + $0x10] sm:$0xf]
      %v537 = vld [vmem:[%s3 + $0x14] sm:$0xf]
      %v538 = vld [vmem:[%s3 + $0x18] sm:$0xf]
      %v539 = vld [vmem:[%s3 + $0x1c] sm:$0xf]
      %v540 = vld [vmem:[%s3 + $0x20] sm:$0xf]
      %v542 = vshrl.u32 %v522, 16
      %v544 = vrot.slane %v542, 7
      %v545 = vshll.u32 %v522, 16
      %v547 = vor.u32 %v544, %v545
      %v549 = vshrl.u32 %v523, 16
      %v551 = vrot.slane %v549, 7
      %v552 = vshll.u32 %v523, 16
      %v554 = vor.u32 %v551, %v552
      %v556 = vshrl.u32 %v524, 16
      %v558 = vrot.slane %v556, 7
      %v559 = vshll.u32 %v524, 16
      %v561 = vor.u32 %v558, %v559
      %v563 = vshrl.u32 %v525, 16
      %v565 = vrot.slane %v563, 7
      %v566 = vshll.u32 %v525, 16
      %v568 = vor.u32 %v565, %v566
      %v570 = vshrl.u32 %v526, 16
      %v572 = vrot.slane %v570, 7
      %v573 = vshll.u32 %v526, 16
      %v575 = vor.u32 %v572, %v573
      %v577 = vshrl.u32 %v527, 16
      %v579 = vrot.slane %v577, 7
      %v580 = vshll.u32 %v527, 16
      %v582 = vor.u32 %v579, %v580
      %v584 = vshrl.u32 %v528, 16
      %v586 = vrot.slane %v584, 7
      %v587 = vshll.u32 %v528, 16
      %v589 = vor.u32 %v586, %v587
      %v591 = vshrl.u32 %v529, 16
      %v593 = vrot.slane %v591, 7
      %v594 = vshll.u32 %v529, 16
      %v596 = vor.u32 %v593, %v594
      %vm605 = vcmask 1040384
      %vm606 = vsmask.f32 256
      %vm607 = vmand %vm605, %vm606
      %v608 = vsel %vm607, 0, %v547
      %v609 = vsel %vm607, 0, %v554
      %v610 = vsel %vm607, 0, %v561
      %v611 = vsel %vm607, 0, %v568
      %v612 = vsel %vm607, 0, %v575
      %v613 = vsel %vm607, 0, %v582
      %v614 = vsel %vm607, 0, %v589
      %v615 = vsel %vm607, 0, %v596
      %v616 = vrot.slane %v545, 1
      %v617 = vor.u32 %v542, %v616
      %v618 = vrot.slane %v552, 1
      %v619 = vor.u32 %v549, %v618
      %v620 = vrot.slane %v559, 1
      %v621 = vor.u32 %v556, %v620
      %v622 = vrot.slane %v566, 1
      %v623 = vor.u32 %v563, %v622
      %v624 = vrot.slane %v573, 1
      %v625 = vor.u32 %v570, %v624
      %v626 = vrot.slane %v580, 1
      %v627 = vor.u32 %v577, %v626
      %v628 = vrot.slane %v587, 1
      %v629 = vor.u32 %v584, %v628
      %v630 = vrot.slane %v594, 1
      %v631 = vor.u32 %v591, %v630
      %vm640 = vcmask 1047552
      %vm641 = vsmask.f32 7424
      %vm642 = vmand %vm640, %vm641
      %v643 = vsel %vm642, %v617, 0
      %v644 = vsel %vm642, %v619, 0
      %v645 = vsel %vm642, %v621, 0
      %v646 = vsel %vm642, %v623, 0
      %v647 = vsel %vm642, %v625, 0
      %v648 = vsel %vm642, %v627, 0
      %v649 = vsel %vm642, %v629, 0
      %v650 = vsel %vm642, %v631, 0
      %v652 = vshrl.u32 %v530, 16
      %v654 = vrot.slane %v652, 7
      %v655 = vshll.u32 %v530, 16
      %v657 = vor.u32 %v654, %v655
      %v659 = vsel %vm607, 0, %v657
      %v660 = vrot.slane %v655, 1
      %v661 = vor.u32 %v652, %v660
      %v663 = vsel %vm642, %v661, 0
      %v665 = vshrl.u32 %v531, 16
      %v667 = vrot.slane %v665, 7
      %v668 = vshll.u32 %v531, 16
      %v670 = vor.u32 %v667, %v668
      %v672 = vsel %vm607, 0, %v670
      %v673 = vrot.slane %v668, 1
      %v674 = vor.u32 %v665, %v673
      %v676 = vsel %vm642, %v674, 0
      %685 = vrot.lane.b32.xlu0 %v522, 8
      %v686 = vpop.permute.xlu0 %685
      %687 = vrot.lane.b32.xlu0 %v523, 8
      %v688 = vpop.permute.xlu0 %687
      %689 = vrot.lane.b32.xlu0 %v524, 8
      %v690 = vpop.permute.xlu0 %689
      %691 = vrot.lane.b32.xlu0 %v525, 8
      %v692 = vpop.permute.xlu0 %691
      %693 = vrot.lane.b32.xlu0 %v526, 8
      %v694 = vpop.permute.xlu0 %693
      %695 = vrot.lane.b32.xlu0 %v527, 8
      %v696 = vpop.permute.xlu0 %695
      %697 = vrot.lane.b32.xlu0 %v528, 8
      %v698 = vpop.permute.xlu0 %697
      %699 = vrot.lane.b32.xlu0 %v529, 8
      %v700 = vpop.permute.xlu0 %699
      %709 = vrot.lane.b32.xlu0 %v643, 16
      %v710 = vpop.permute.xlu0 %709
      %711 = vrot.lane.b32.xlu0 %v644, 16
      %v712 = vpop.permute.xlu0 %711
      %713 = vrot.lane.b32.xlu0 %v645, 16
      %v714 = vpop.permute.xlu0 %713
      %715 = vrot.lane.b32.xlu0 %v646, 16
      %v716 = vpop.permute.xlu0 %715
      %717 = vrot.lane.b32.xlu0 %v647, 16
      %v718 = vpop.permute.xlu0 %717
      %719 = vrot.lane.b32.xlu0 %v648, 16
      %v720 = vpop.permute.xlu0 %719
      %721 = vrot.lane.b32.xlu0 %v649, 16
      %v722 = vpop.permute.xlu0 %721
      %723 = vrot.lane.b32.xlu0 %v650, 16
      %v724 = vpop.permute.xlu0 %723
      %733 = vrot.lane.b32.xlu0 %v609, 24
      %v734 = vpop.permute.xlu0 %733
      %735 = vrot.lane.b32.xlu0 %v610, 24
      %v736 = vpop.permute.xlu0 %735
      %737 = vrot.lane.b32.xlu0 %v611, 24
      %v738 = vpop.permute.xlu0 %737
      %739 = vrot.lane.b32.xlu0 %v612, 24
      %v740 = vpop.permute.xlu0 %739
      %741 = vrot.lane.b32.xlu0 %v613, 24
      %v742 = vpop.permute.xlu0 %741
      %743 = vrot.lane.b32.xlu0 %v614, 24
      %v744 = vpop.permute.xlu0 %743
      %745 = vrot.lane.b32.xlu0 %v615, 24
      %v746 = vpop.permute.xlu0 %745
      %747 = vrot.lane.b32.xlu0 %v659, 24
      %v748 = vpop.permute.xlu0 %747
      %750 = vrot.lane.b32.xlu0 %v523, 32
      %v751 = vpop.permute.xlu0 %750
      %752 = vrot.lane.b32.xlu0 %v524, 32
      %v753 = vpop.permute.xlu0 %752
      %754 = vrot.lane.b32.xlu0 %v525, 32
      %v755 = vpop.permute.xlu0 %754
      %756 = vrot.lane.b32.xlu0 %v526, 32
      %v757 = vpop.permute.xlu0 %756
      %758 = vrot.lane.b32.xlu0 %v527, 32
      %v759 = vpop.permute.xlu0 %758
      %760 = vrot.lane.b32.xlu0 %v528, 32
      %v761 = vpop.permute.xlu0 %760
      %762 = vrot.lane.b32.xlu0 %v529, 32
      %v763 = vpop.permute.xlu0 %762
      %764 = vrot.lane.b32.xlu0 %v530, 32
      %v765 = vpop.permute.xlu0 %764
      %767 = vrot.lane.b32.xlu0 %v644, 40
      %v768 = vpop.permute.xlu0 %767
      %769 = vrot.lane.b32.xlu0 %v645, 40
      %v770 = vpop.permute.xlu0 %769
      %771 = vrot.lane.b32.xlu0 %v646, 40
      %v772 = vpop.permute.xlu0 %771
      %773 = vrot.lane.b32.xlu0 %v647, 40
      %v774 = vpop.permute.xlu0 %773
      %775 = vrot.lane.b32.xlu0 %v648, 40
      %v776 = vpop.permute.xlu0 %775
      %777 = vrot.lane.b32.xlu0 %v649, 40
      %v778 = vpop.permute.xlu0 %777
      %779 = vrot.lane.b32.xlu0 %v650, 40
      %v780 = vpop.permute.xlu0 %779
      %781 = vrot.lane.b32.xlu0 %v663, 40
      %v782 = vpop.permute.xlu0 %781
      %784 = vrot.lane.b32.xlu0 %v610, 48
      %v785 = vpop.permute.xlu0 %784
      %786 = vrot.lane.b32.xlu0 %v611, 48
      %v787 = vpop.permute.xlu0 %786
      %788 = vrot.lane.b32.xlu0 %v612, 48
      %v789 = vpop.permute.xlu0 %788
      %790 = vrot.lane.b32.xlu0 %v613, 48
      %v791 = vpop.permute.xlu0 %790
      %792 = vrot.lane.b32.xlu0 %v614, 48
      %v793 = vpop.permute.xlu0 %792
      %794 = vrot.lane.b32.xlu0 %v615, 48
      %v795 = vpop.permute.xlu0 %794
      %796 = vrot.lane.b32.xlu0 %v659, 48
      %v797 = vpop.permute.xlu0 %796
      %798 = vrot.lane.b32.xlu0 %v672, 48
      %v799 = vpop.permute.xlu0 %798
      %801 = vrot.lane.b32.xlu0 %v524, 56
      %v802 = vpop.permute.xlu0 %801
      %803 = vrot.lane.b32.xlu0 %v525, 56
      %v804 = vpop.permute.xlu0 %803
      %805 = vrot.lane.b32.xlu0 %v526, 56
      %v806 = vpop.permute.xlu0 %805
      %807 = vrot.lane.b32.xlu0 %v527, 56
      %v808 = vpop.permute.xlu0 %807
      %809 = vrot.lane.b32.xlu0 %v528, 56
      %v810 = vpop.permute.xlu0 %809
      %811 = vrot.lane.b32.xlu0 %v529, 56
      %v812 = vpop.permute.xlu0 %811
      %813 = vrot.lane.b32.xlu0 %v530, 56
      %v814 = vpop.permute.xlu0 %813
      %815 = vrot.lane.b32.xlu0 %v531, 56
      %v816 = vpop.permute.xlu0 %815
      %818 = vrot.lane.b32.xlu0 %v645, 64
      %v819 = vpop.permute.xlu0 %818
      %820 = vrot.lane.b32.xlu0 %v646, 64
      %v821 = vpop.permute.xlu0 %820
      %822 = vrot.lane.b32.xlu0 %v647, 64
      %v823 = vpop.permute.xlu0 %822
      %824 = vrot.lane.b32.xlu0 %v648, 64
      %v825 = vpop.permute.xlu0 %824
      %826 = vrot.lane.b32.xlu0 %v649, 64
      %v827 = vpop.permute.xlu0 %826
      %828 = vrot.lane.b32.xlu0 %v650, 64
      %v829 = vpop.permute.xlu0 %828
      %830 = vrot.lane.b32.xlu0 %v663, 64
      %v831 = vpop.permute.xlu0 %830
      %832 = vrot.lane.b32.xlu0 %v676, 64
      %v833 = vpop.permute.xlu0 %832
      %vm834 = vcmask 64512
      %v837 = vsel %vm834, %v608, %v686
      %v840 = vsel %vm834, %v609, %v688
      %v843 = vsel %vm834, %v610, %v690
      %v846 = vsel %vm834, %v611, %v692
      %v849 = vsel %vm834, %v612, %v694
      %v852 = vsel %vm834, %v613, %v696
      %v855 = vsel %vm834, %v614, %v698
      %v858 = vsel %vm834, %v615, %v700
      %vm859 = vcmask 130048
      %v861 = vsel %vm859, %v837, %v710
      %v863 = vsel %vm859, %v840, %v712
      %v865 = vsel %vm859, %v843, %v714
      %v867 = vsel %vm859, %v846, %v716
      %v869 = vsel %vm859, %v849, %v718
      %v871 = vsel %vm859, %v852, %v720
      %v873 = vsel %vm859, %v855, %v722
      %v875 = vsel %vm859, %v858, %v724
      %vm876 = vcmask 195584
      %v878 = vsel %vm876, %v861, %v734
      %v880 = vsel %vm876, %v863, %v736
      %v882 = vsel %vm876, %v865, %v738
      %v884 = vsel %vm876, %v867, %v740
      %v886 = vsel %vm876, %v869, %v742
      %v888 = vsel %vm876, %v871, %v744
      %v890 = vsel %vm876, %v873, %v746
      %v892 = vsel %vm876, %v875, %v748
      %vm893 = vcmask 261120
      %v895 = vsel %vm893, %v878, %v751
      %v897 = vsel %vm893, %v880, %v753
      %v899 = vsel %vm893, %v882, %v755
      %v901 = vsel %vm893, %v884, %v757
      %v903 = vsel %vm893, %v886, %v759
      %v905 = vsel %vm893, %v888, %v761
      %v907 = vsel %vm893, %v890, %v763
      %v909 = vsel %vm893, %v892, %v765
      %vm910 = vcmask 326656
      %v912 = vsel %vm910, %v895, %v768
      %v914 = vsel %vm910, %v897, %v770
      %v916 = vsel %vm910, %v899, %v772
      %v918 = vsel %vm910, %v901, %v774
      %v920 = vsel %vm910, %v903, %v776
      %v922 = vsel %vm910, %v905, %v778
      %v924 = vsel %vm910, %v907, %v780
      %v926 = vsel %vm910, %v909, %v782
      %vm927 = vcmask 392192
      %v929 = vsel %vm927, %v912, %v785
      %v931 = vsel %vm927, %v914, %v787
      %v933 = vsel %vm927, %v916, %v789
      %v935 = vsel %vm927, %v918, %v791
      %v937 = vsel %vm927, %v920, %v793
      %v939 = vsel %vm927, %v922, %v795
      %v941 = vsel %vm927, %v924, %v797
      %v943 = vsel %vm927, %v926, %v799
      %vm944 = vcmask 457728
      %v946 = vsel %vm944, %v929, %v802
      %v948 = vsel %vm944, %v931, %v804
      %v950 = vsel %vm944, %v933, %v806
      %v952 = vsel %vm944, %v935, %v808
      %v954 = vsel %vm944, %v937, %v810
      %v956 = vsel %vm944, %v939, %v812
      %v958 = vsel %vm944, %v941, %v814
      %v960 = vsel %vm944, %v943, %v816
      %vm961 = vcmask 523264
      %v963 = vsel %vm961, %v946, %v819
      %v965 = vsel %vm961, %v948, %v821
      %v967 = vsel %vm961, %v950, %v823
      %v969 = vsel %vm961, %v952, %v825
      %v971 = vsel %vm961, %v954, %v827
      %v973 = vsel %vm961, %v956, %v829
      %v975 = vsel %vm961, %v958, %v831
      %v977 = vsel %vm961, %v960, %v833
      %v987 = vunpack.c.l.b16 %v532
      %v988 = vunpack.c.l.b16 %v533
      %v989 = vunpack.c.l.b16 %v534
      %v990 = vunpack.c.l.b16 %v535
      %v991 = vunpack.c.l.b16 %v536
      %v992 = vunpack.c.l.b16 %v537
      %v993 = vunpack.c.l.b16 %v538
      %v994 = vunpack.c.l.b16 %v539
      %v995 = vunpack.c.l.b16 %v540
      %v996 = vpack.c.b16 %v988, %v987
      %v997 = vpack.c.b16 %v990, %v989
      %v998 = vpack.c.b16 %v992, %v991
      %v999 = vpack.c.b16 %v994, %v993
      %v1000 = vpack.c.b16 %v995, %v995
      %vm1005 = vcmask 588800
      %v1006 = vsel %vm1005, %v963, 0
      %v1008 = vsel %vm1005, %v965, 0
      %v1010 = vsel %vm1005, %v967, 0
      %v1012 = vsel %vm1005, %v969, 0
      %v1014 = vsel %vm1005, %v971, 0
      %v1016 = vsel %vm1005, %v973, 0
      %v1018 = vsel %vm1005, %v975, 0
      %v1020 = vsel %vm1005, %v977, 0
      %vm1022 = vcmask 1043456
      %v1024 = vsel %vm1022, %v1000, 0
      %1026 = vmatprep.subr.bf16.mxu0 0
      %1027 = vmatpush1.bf16.msra.mxu0 %v996
      %1028 = vmatprep.subr.bf16.mxu0 0
      %1029 = vmatpush1.bf16.msra.mxu0 %v997
      %1030 = vmatprep.subr.bf16.mxu0 0
      %1031 = vmatpush1.bf16.msra.mxu0 %v998
      %1032 = vmatprep.subr.bf16.mxu0 0
      %1033 = vmatpush1.bf16.msra.mxu0 %v999
      %1034 = vmatprep.subr.bf16.mxu0 0
      %1035 = vmatpush1.bf16.msra.mxu0 %v1024
      %1036 = vmatprep.subr.bf16.mxu0 0
      %1037 = vmatpush1.bf16.msra.mxu0 0
      %1038 = vmatprep.subr.bf16.mxu0 0
      %1039 = vmatpush1.bf16.msra.mxu0 0
      %1040 = vmatprep.subr.bf16.mxu0 0
      %1041 = vmatpush1.bf16.msra.mxu0 0
      %1042 = vmatprep.subr.bf16.mxu0 0
      %1043 = vmatpush1.bf16.msra.mxu0 0
      %1044 = vmatprep.subr.bf16.mxu0 0
      %1045 = vmatpush1.bf16.msra.mxu0 0
      %1046 = vmatprep.subr.bf16.mxu0 0
      %1047 = vmatpush1.bf16.msra.mxu0 0
      %1048 = vmatprep.subr.bf16.mxu0 0
      %1049 = vmatpush1.bf16.msra.mxu0 0
      %1050 = vmatprep.subr.bf16.mxu0 0
      %1051 = vmatpush1.bf16.msra.mxu0 0
      %1052 = vmatprep.subr.bf16.mxu0 0
      %1053 = vmatpush1.bf16.msra.mxu0 0
      %1054 = vmatprep.subr.bf16.mxu0 0
      %1055 = vmatpush1.bf16.msra.mxu0 0
      %1056 = vmatprep.subr.bf16.mxu0 0
      %1057 = vmatpush1.bf16.msra.mxu0 0
      %1058 = vmatprep.mubr.bf16.mxu0 0
      %1059 = vmatmul.mubr.bf16.gmra.mrb[0].mxu0 %v1006
      %v1060 = vpop.f32.mrb[0].mxu0
      %v1061 = vadd.f32 0.0, %v1060
      %v1062 = vpop.f32.mrb[0].mxu0
      %v1063 = vpop.f32.mrb[0].mxu0
      %v1064 = vadd.f32 0.0, %v1063
      %v1065 = vpop.f32.mrb[0].mxu0
      %1066 = vmatprep.mubr.bf16.mxu0 0
      %1067 = vmatmul.mubr.bf16.gmra.mrb[0].mxu0 %v1008
      %v1068 = vpop.f32.mrb[0].mxu0
      %v1069 = vadd.f32 0.0, %v1068
      %v1070 = vpop.f32.mrb[0].mxu0
      %v1071 = vpop.f32.mrb[0].mxu0
      %v1072 = vadd.f32 0.0, %v1071
      %v1073 = vpop.f32.mrb[0].mxu0
      %1074 = vmatprep.mubr.bf16.mxu0 0
      %1075 = vmatmul.mubr.bf16.gmra.mrb[0].mxu0 %v1010
      %v1076 = vpop.f32.mrb[0].mxu0
      %v1077 = vadd.f32 0.0, %v1076
      %v1078 = vpop.f32.mrb[0].mxu0
      %v1079 = vpop.f32.mrb[0].mxu0
      %v1080 = vadd.f32 0.0, %v1079
      %v1081 = vpop.f32.mrb[0].mxu0
      %1082 = vmatprep.mubr.bf16.mxu0 0
      %1083 = vmatmul.mubr.bf16.gmra.mrb[0].mxu0 %v1012
      %v1084 = vpop.f32.mrb[0].mxu0
      %v1085 = vadd.f32 0.0, %v1084
      %v1086 = vpop.f32.mrb[0].mxu0
      %v1087 = vpop.f32.mrb[0].mxu0
      %v1088 = vadd.f32 0.0, %v1087
      %v1089 = vpop.f32.mrb[0].mxu0
      %1090 = vmatprep.mubr.bf16.mxu0 0
      %1091 = vmatmul.mubr.bf16.gmra.mrb[0].mxu0 %v1014
      %v1092 = vpop.f32.mrb[0].mxu0
      %v1093 = vadd.f32 0.0, %v1092
      %v1094 = vpop.f32.mrb[0].mxu0
      %v1095 = vpop.f32.mrb[0].mxu0
      %v1096 = vadd.f32 0.0, %v1095
      %v1097 = vpop.f32.mrb[0].mxu0
      %1098 = vmatprep.mubr.bf16.mxu0 0
      %1099 = vmatmul.mubr.bf16.gmra.mrb[0].mxu0 %v1016
      %v1100 = vpop.f32.mrb[0].mxu0
      %v1101 = vadd.f32 0.0, %v1100
      %v1102 = vpop.f32.mrb[0].mxu0
      %v1103 = vpop.f32.mrb[0].mxu0
      %v1104 = vadd.f32 0.0, %v1103
      %v1105 = vpop.f32.mrb[0].mxu0
      %1106 = vmatprep.mubr.bf16.mxu0 0
      %1107 = vmatmul.mubr.bf16.gmra.mrb[0].mxu0 %v1018
      %v1108 = vpop.f32.mrb[0].mxu0
      %v1109 = vadd.f32 0.0, %v1108
      %v1110 = vpop.f32.mrb[0].mxu0
      %v1111 = vpop.f32.mrb[0].mxu0
      %v1112 = vadd.f32 0.0, %v1111
      %v1113 = vpop.f32.mrb[0].mxu0
      %1114 = vmatprep.mubr.bf16.mxu0 0
      %1115 = vmatmul.mubr.bf16.gmra.mrb[0].mxu0 %v1020
      %v1116 = vpop.f32.mrb[0].mxu0
      %v1117 = vadd.f32 0.0, %v1116
      %v1118 = vpop.f32.mrb[0].mxu0
      %v1119 = vpop.f32.mrb[0].mxu0
      %v1120 = vadd.f32 0.0, %v1119
      %v1121 = vpop.f32.mrb[0].mxu0
      %1122 = vdwg.mxu0
      %1123 = vst.msk [vmem:[%s269] sm:$0xff] %vm834, %v1061
      %1124 = vst.msk [vmem:[%s269 + $0x8] sm:$0xff] %vm834, %v1064
      %1125 = vst.msk [vmem:[%s269 + $0x10] sm:$0xff] %vm834, %v1069
      %1126 = vst.msk [vmem:[%s269 + $0x18] sm:$0xff] %vm834, %v1072
      %1127 = vst.msk [vmem:[%s269 + $0x20] sm:$0xff] %vm834, %v1077
      %1128 = vst.msk [vmem:[%s269 + $0x28] sm:$0xff] %vm834, %v1080
      %1129 = vst.msk [vmem:[%s269 + $0x30] sm:$0xff] %vm834, %v1085
      %1130 = vst.msk [vmem:[%s269 + $0x38] sm:$0xff] %vm834, %v1088
      %1131 = vst.msk [vmem:[%s269 + $0x40] sm:$0xff] %vm834, %v1093
      %1132 = vst.msk [vmem:[%s269 + $0x48] sm:$0xff] %vm834, %v1096
      %1133 = vst.msk [vmem:[%s269 + $0x50] sm:$0xff] %vm834, %v1101
      %1134 = vst.msk [vmem:[%s269 + $0x58] sm:$0xff] %vm834, %v1104
      %1135 = vst.msk [vmem:[%s269 + $0x60] sm:$0xff] %vm834, %v1109
      %1136 = vst.msk [vmem:[%s269 + $0x68] sm:$0xff] %vm834, %v1112
      %1137 = vst.msk [vmem:[%s269 + $0x70] sm:$0xff] %vm834, %v1117
      %1138 = vst.msk [vmem:[%s269 + $0x78] sm:$0xff] %vm834, %v1120
      %v1139 = vsel %vm834, %v1061, 0.0
      %v1140 = vsel %vm834, %v1064, 0.0
      %v1141 = vadd.f32 %v1139, %v1140
      %v1142 = vsel %vm834, %v1069, 0.0
      %v1143 = vadd.f32 %v1141, %v1142
      %v1144 = vsel %vm834, %v1072, 0.0
      %v1145 = vadd.f32 %v1143, %v1144
      %v1146 = vsel %vm834, %v1077, 0.0
      %v1147 = vadd.f32 %v1145, %v1146
      %v1148 = vsel %vm834, %v1080, 0.0
      %v1149 = vadd.f32 %v1147, %v1148
      %v1150 = vsel %vm834, %v1085, 0.0
      %v1151 = vadd.f32 %v1149, %v1150
      %v1152 = vsel %vm834, %v1088, 0.0
      %v1153 = vadd.f32 %v1151, %v1152
      %v1154 = vsel %vm834, %v1093, 0.0
      %v1155 = vadd.f32 %v1153, %v1154
      %v1156 = vsel %vm834, %v1096, 0.0
      %v1157 = vadd.f32 %v1155, %v1156
      %v1158 = vsel %vm834, %v1101, 0.0
      %v1159 = vadd.f32 %v1157, %v1158
      %v1160 = vsel %vm834, %v1104, 0.0
      %v1161 = vadd.f32 %v1159, %v1160
      %v1162 = vsel %vm834, %v1109, 0.0
      %v1163 = vadd.f32 %v1161, %v1162
      %v1164 = vsel %vm834, %v1112, 0.0
      %v1165 = vadd.f32 %v1163, %v1164
      %v1166 = vsel %vm834, %v1117, 0.0
      %v1167 = vadd.f32 %v1165, %v1166
      %v1168 = vsel %vm834, %v1120, 0.0
      %v1169 = vadd.f32 %v1167, %v1168
      %v1170 = vrot.slane %v1169, 4
      %v1171 = vadd.f32 %v1169, %v1170
      %v1172 = vrot.slane %v1171, 2
      %v1173 = vadd.f32 %v1171, %v1172
      %v1174 = vrot.slane %v1173, 1
      %v1175 = vadd.f32 %v1173, %v1174
      %v1176 = vmul.f32 %v1061, %v1061
      %v1177 = vmul.f32 %v1064, %v1064
      %v1178 = vmul.f32 %v1069, %v1069
      %v1179 = vmul.f32 %v1072, %v1072
      %v1180 = vmul.f32 %v1077, %v1077
      %v1181 = vmul.f32 %v1080, %v1080
      %v1182 = vmul.f32 %v1085, %v1085
      %v1183 = vmul.f32 %v1088, %v1088
      %v1184 = vmul.f32 %v1093, %v1093
      %v1185 = vmul.f32 %v1096, %v1096
      %v1186 = vmul.f32 %v1101, %v1101
      %v1187 = vmul.f32 %v1104, %v1104
      %v1188 = vmul.f32 %v1109, %v1109
      %v1189 = vmul.f32 %v1112, %v1112
      %v1190 = vmul.f32 %v1117, %v1117
      %v1191 = vmul.f32 %v1120, %v1120
      %v1192 = vsel %vm834, %v1176, 0.0
      %v1193 = vsel %vm834, %v1177, 0.0
      %v1194 = vadd.f32 %v1192, %v1193
      %v1195 = vsel %vm834, %v1178, 0.0
      %v1196 = vadd.f32 %v1194, %v1195
      %v1197 = vsel %vm834, %v1179, 0.0
      %v1198 = vadd.f32 %v1196, %v1197
      %v1199 = vsel %vm834, %v1180, 0.0
      %v1200 = vadd.f32 %v1198, %v1199
      %v1201 = vsel %vm834, %v1181, 0.0
      %v1202 = vadd.f32 %v1200, %v1201
      %v1203 = vsel %vm834, %v1182, 0.0
      %v1204 = vadd.f32 %v1202, %v1203
      %v1205 = vsel %vm834, %v1183, 0.0
      %v1206 = vadd.f32 %v1204, %v1205
      %v1207 = vsel %vm834, %v1184, 0.0
      %v1208 = vadd.f32 %v1206, %v1207
      %v1209 = vsel %vm834, %v1185, 0.0
      %v1210 = vadd.f32 %v1208, %v1209
      %v1211 = vsel %vm834, %v1186, 0.0
      %v1212 = vadd.f32 %v1210, %v1211
      %v1213 = vsel %vm834, %v1187, 0.0
      %v1214 = vadd.f32 %v1212, %v1213
      %v1215 = vsel %vm834, %v1188, 0.0
      %v1216 = vadd.f32 %v1214, %v1215
      %v1217 = vsel %vm834, %v1189, 0.0
      %v1218 = vadd.f32 %v1216, %v1217
      %v1219 = vsel %vm834, %v1190, 0.0
      %v1220 = vadd.f32 %v1218, %v1219
      %v1221 = vsel %vm834, %v1191, 0.0
      %v1222 = vadd.f32 %v1220, %v1221
      %v1223 = vrot.slane %v1222, 4
      %v1224 = vadd.f32 %v1222, %v1223
      %v1225 = vrot.slane %v1224, 2
      %v1226 = vadd.f32 %v1224, %v1225
      %v1227 = vrot.slane %v1226, 1
      %v1228 = vadd.f32 %v1226, %v1227
      %vm1229 = vcmask 1040384
      %v1230 = vsel %vm1229, %v1175, %v1228
      %p1231 = scmp.eq.s32.totalorder %s22, 0
      // Predicated region
      $region37: #{_lambda_.4} parent=35 // pred_check
        %p1232 = pneg %p1231
      $region38: #{_lambda_.4} parent=35 // pred_check_branch
        %1234 = sbr.rel (%p1232) target = $region40
      $region39: #{_lambda_.4} parent=35 // pred_region
        %vm1235 = vcmask 58368
        %1236 = vst.msk [vmem:[#allocation2] sm:$0x3] %vm1235, 0.0
      $region40: #{_lambda_.4} parent=35 // pred_fallthru
        _
      %v1237 = vld [vmem:[#allocation2] sm:$0x3]
      %v1238 = vadd.f32 %v1237, %v1230
      %vm1239 = vcmask 58368
      %1240 = vst.msk [vmem:[#allocation2] sm:$0x3] %vm1239, %v1238
      %p1241 = scmp.eq.s32.totalorder %s22, 1
      // Predicated region
      $region41: #{_lambda_.4} parent=35 // pred_check
        %p1242 = pneg %p1241
      $region42: #{_lambda_.4} parent=35 // pred_check_branch
        %1244 = sbr.rel (%p1242) target = $region44
      $region43: #{_lambda_.4} parent=35 // pred_region
        %v1245 = vld [vmem:[#allocation2] sm:$0x3]
        %1246 = vst.msk [vmem:[%s274] sm:$0x3] %vm1239, %v1245
      $region44: #{_lambda_.4} parent=35 // pred_fallthru
        _
      %s1247 = smul.u32 8, %s22
      %p1248 = scmp.lt.s32.totalorder %s21, 1
      %s1249 = scalar_select %p1248, %s21, 1
      %p1250 = scmp.lt.s32.totalorder %s1247, 15
      %s1251 = scalar_select %p1250, %s1247, 15
      %s1252 = smul.addr %s1251, 2
      %s1253 = smul.addr %s1249, 32
      %s1254 = sadd.s32 %s1252, %s1253
      %s1255 = smul.addr %s1254, 8
      %s1256 = scalar_lea.vmem %s4, %s1255
      %p1257 = scmp.lt.s32.totalorder %s21, 1
      %s1258 = scalar_select %p1257, %s21, 1
      %s1259 = smul.addr %s1258, 2
      %s1260 = scalar_lea.vmem %s5, %s1259
      // Predicated region
      $region45: #{_lambda_.4} parent=35 // pred_check
        %p1261 = pneg %p142
      $region46: #{_lambda_.4} parent=35 // pred_check_branch
        %1263 = sbr.rel (%p1261) target = $region48
      $region47: #{_lambda_.4} parent=35 // pred_region
        %s1264 = smul.u32 8, %s22
      $region48: #{_lambda_.4} parent=35 // pred_fallthru
        _
      // Predicated region
      $region49: #{_lambda_.4} parent=35 // pred_check
        %p1265 = pneg %p168
      $region50: #{_lambda_.4} parent=35 // pred_check_branch
        %1267 = sbr.rel (%p1265) target = $region52
      $region51: #{_lambda_.4} parent=35 // pred_region
        _
      $region52: #{_lambda_.4} parent=35 // pred_fallthru
        _
    $region36: #{_lambda_.4} parent=5 // pred_fallthru
      _
    %p1268 = scmp.le.s32.totalorder 2, %s12
    // Predicated region
    $region53: #{_lambda_.4} parent=5 // pred_check
      %p1269 = pneg %p1268
    $region54: #{_lambda_.4} parent=5 // pred_check_branch
      %1271 = sbr.rel (%p1269) target = $region56
    $region55: #{_lambda_.4} parent=5 // pred_region
      %s1272 = ssub.s32 %s12, 2
      // Predicated region
      $region57: #{_lambda_.4} parent=55 // pred_check
        %p1273 = pneg %p148
      $region58: #{_lambda_.4} parent=55 // pred_check_branch
        %1275 = sbr.rel (%p1273) target = $region60
      $region59: #{_lambda_.4} parent=55 // pred_region
        %s1276 = smul.u32 8, %s24
        %p1277 = scmp.lt.s32.totalorder %s23, 1
        %s1278 = scalar_select %p1277, %s23, 1
        %p1279 = scmp.lt.s32.totalorder %s1276, 15
        %s1280 = scalar_select %p1279, %s1276, 15
        %s1281 = smul.addr %s1280, 2
        %s1282 = smul.addr %s1278, 32
        %s1283 = sadd.s32 %s1281, %s1282
        %s1284 = smul.addr %s1283, 8
        %s1285 = scalar_lea.vmem %s4, %s1284
      $region60: #{_lambda_.4} parent=55 // pred_fallthru
        _
      // Predicated region
      $region61: #{_lambda_.4} parent=55 // pred_check
        %p1286 = pneg %p174
      $region62: #{_lambda_.4} parent=55 // pred_check_branch
        %1288 = sbr.rel (%p1286) target = $region64
      $region63: #{_lambda_.4} parent=55 // pred_region
        %p1289 = scmp.lt.s32.totalorder %s23, 1
        %s1290 = scalar_select %p1289, %s23, 1
        %s1291 = smul.addr %s1290, 2
        %s1292 = scalar_lea.vmem %s5, %s1291
      $region64: #{_lambda_.4} parent=55 // pred_fallthru
        _
    $region56: #{_lambda_.4} parent=5 // pred_fallthru
      _
  $region6: #{_lambda_.4} parent=0 // loop_footer
    %s16 = sadd.s32 1, %s12
  $region7: #{_lambda_.4} parent=0 // loop_footer_branch
    %11 = sbr.rel target = $region3
  $region8: #{_lambda_.4} parent=0 // loop_exit
    _

// kernel: _lambda_.5
$region0: #{_lambda_.5}
  #allocation0 [shape = 'u32[]', space=smem, size = 0x4, offset = 0x4, fixed_abs, tag = 'smem constant byte address 0x4 - core index']
  #allocation1 [shape = 'u32[144,128]{1,0:T(1,128)}', space=vmem, size = 0x12000, scoped, tag = 'internal scratch']
  %s0 = inlined_call_operand.vmem [shape: f32[32,128], index: 0, kind: input, shape index: {}]
  %s1 = inlined_call_operand.vmem [shape: f32[32,128], index: 1, kind: input, shape index: {}]
  %s2 = inlined_call_operand.vmem [shape: f32[1,128], index: 2, kind: input, shape index: {}]
  %s3 = inlined_call_operand.vmem [shape: f32[1,128], index: 3, kind: input, shape index: {}]
  %s4 = inlined_call_operand.vmem [shape: f32[32,128], index: 4, kind: output, shape index: {}]
  %s5 = sld [smem:[#allocation0]]
  $region49: #{_lambda_.5} parent=0
    _
  %s7 = ssub.s32 1, %s5
  %s8 = scalar_select 0, %s7, %s5
  loop: start=0, step=1, limit=6
  $region2: #{_lambda_.5} parent=0 // loop_pre_header
    _
  $region3: #{_lambda_.5} parent=0 // loop_header
    %s10 = sphi 0, %s14
    %p11 = scmp.ge.s32.totalorder %s10, 6
    %s20 = sphi 0, %s22
    %s23 = sphi 0, %s20
    %s24 = sphi 0, %s23
    %s40 = sphi 0, %s24
    %s46 = sphi 0, %s48
    %s49 = sphi 0, %s46
    %s50 = sphi 0, %s49
    %s66 = sphi 0, %s50
    %s70 = sphi 0, %s70
    %s72 = sphi 0, %s70
    %s73 = sphi 0, %s72
    %s87 = sphi 0, %s73
    %s91 = sphi 0, %s91
    %s93 = sphi 0, %s91
    %s94 = sphi 0, %s93
    %s108 = sphi 0, %s94
    %s114 = sphi 0, %s116
    %s117 = sphi 0, %s114
    %s118 = sphi 0, %s117
    %s134 = sphi 0, %s118
  $region4: #{_lambda_.5} parent=0 // loop_header_branch
    %13 = sbr.rel (%p11) target = $region8
  $region5: #{_lambda_.5} parent=0 // loop_body
    %s15 = ssub.s32 %s10, 1
    %s16 = ssub.s32 %s10, 2
    %s17 = sadd.s32 %s10, 1
    %s18 = ssub.s32 %s10, %s17
    %p19 = scmp.eq.s32.totalorder %s18, 0
    %s21 = sadd.s32 %s20, 1
    %s22 = scalar_select %p19, %s20, %s21
    %p25 = pneg %p19
    %p26 = scmp.eq.s32.totalorder %s10, 3
    %p27 = por %p25, %p26
    %p28 = scmp.ne.s32.totalorder %s20, %s23
    %p29 = scmp.eq.s32.totalorder %s10, 0
    %p30 = por %p28, %p29
    %p31 = scmp.ne.s32.totalorder %s20, %s23
    %p32 = scmp.eq.s32.totalorder %s15, 3
    %p33 = por %p31, %p32
    %p34 = scmp.ne.s32.totalorder %s23, %s24
    %p35 = scmp.eq.s32.totalorder %s15, 0
    %p36 = por %p34, %p35
    %p37 = scmp.ne.s32.totalorder %s23, %s24
    %p38 = scmp.eq.s32.totalorder %s16, 3
    %p39 = por %p37, %p38
    %p41 = scmp.ne.s32.totalorder %s24, %s40
    %p42 = scmp.eq.s32.totalorder %s16, 0
    %p43 = por %p41, %p42
    %s44 = ssub.s32 %s10, %s17
    %p45 = scmp.eq.s32.totalorder %s44, 0
    %s47 = sadd.s32 %s46, 1
    %s48 = scalar_select %p45, %s46, %s47
    %p51 = pneg %p45
    %p52 = scmp.eq.s32.totalorder %s10, 3
    %p53 = por %p51, %p52
    %p54 = scmp.ne.s32.totalorder %s46, %s49
    %p55 = scmp.eq.s32.totalorder %s10, 0
    %p56 = por %p54, %p55
    %p57 = scmp.ne.s32.totalorder %s46, %s49
    %p58 = scmp.eq.s32.totalorder %s15, 3
    %p59 = por %p57, %p58
    %p60 = scmp.ne.s32.totalorder %s49, %s50
    %p61 = scmp.eq.s32.totalorder %s15, 0
    %p62 = por %p60, %p61
    %p63 = scmp.ne.s32.totalorder %s49, %s50
    %p64 = scmp.eq.s32.totalorder %s16, 3
    %p65 = por %p63, %p64
    %p67 = scmp.ne.s32.totalorder %s50, %s66
    %p68 = scmp.eq.s32.totalorder %s16, 0
    %p69 = por %p67, %p68
    %s71 = sadd.s32 %s70, 1
    %p74 = scmp.eq.s32.totalorder %s10, 3
    %p75 = scmp.ne.s32.totalorder %s70, %s72
    %p76 = scmp.eq.s32.totalorder %s10, 0
    %p77 = por %p75, %p76
    %p78 = scmp.ne.s32.totalorder %s70, %s72
    %p79 = scmp.eq.s32.totalorder %s15, 3
    %p80 = por %p78, %p79
    %p81 = scmp.ne.s32.totalorder %s72, %s73
    %p82 = scmp.eq.s32.totalorder %s15, 0
    %p83 = por %p81, %p82
    %p84 = scmp.ne.s32.totalorder %s72, %s73
    %p85 = scmp.eq.s32.totalorder %s16, 3
    %p86 = por %p84, %p85
    %p88 = scmp.ne.s32.totalorder %s73, %s87
    %p89 = scmp.eq.s32.totalorder %s16, 0
    %p90 = por %p88, %p89
    %s92 = sadd.s32 %s91, 1
    %p95 = scmp.eq.s32.totalorder %s10, 3
    %p96 = scmp.ne.s32.totalorder %s91, %s93
    %p97 = scmp.eq.s32.totalorder %s10, 0
    %p98 = por %p96, %p97
    %p99 = scmp.ne.s32.totalorder %s91, %s93
    %p100 = scmp.eq.s32.totalorder %s15, 3
    %p101 = por %p99, %p100
    %p102 = scmp.ne.s32.totalorder %s93, %s94
    %p103 = scmp.eq.s32.totalorder %s15, 0
    %p104 = por %p102, %p103
    %p105 = scmp.ne.s32.totalorder %s93, %s94
    %p106 = scmp.eq.s32.totalorder %s16, 3
    %p107 = por %p105, %p106
    %p109 = scmp.ne.s32.totalorder %s94, %s108
    %p110 = scmp.eq.s32.totalorder %s16, 0
    %p111 = por %p109, %p110
    %s112 = ssub.s32 %s10, %s17
    %p113 = scmp.eq.s32.totalorder %s112, 0
    %s115 = sadd.s32 %s114, 1
    %s116 = scalar_select %p113, %s114, %s115
    %p119 = pneg %p113
    %p120 = scmp.eq.s32.totalorder %s10, 3
    %p121 = por %p119, %p120
    %p122 = scmp.ne.s32.totalorder %s114, %s117
    %p123 = scmp.eq.s32.totalorder %s10, 0
    %p124 = por %p122, %p123
    %p125 = scmp.ne.s32.totalorder %s114, %s117
    %p126 = scmp.eq.s32.totalorder %s15, 3
    %p127 = por %p125, %p126
    %p128 = scmp.ne.s32.totalorder %s117, %s118
    %p129 = scmp.eq.s32.totalorder %s15, 0
    %p130 = por %p128, %p129
    %p131 = scmp.ne.s32.totalorder %s117, %s118
    %p132 = scmp.eq.s32.totalorder %s16, 3
    %p133 = por %p131, %p132
    %p135 = scmp.ne.s32.totalorder %s118, %s134
    %p136 = scmp.eq.s32.totalorder %s16, 0
    %p137 = por %p135, %p136
    %p138 = scmp.le.s32.totalorder 1, %s10
    %p139 = scmp.lt.s32.totalorder %s10, 5
    %p140 = pnand %p138, %p139
    %p141 = pneg %p140
    // Predicated region
    $region9: #{_lambda_.5} parent=5 // pred_check
      _
    $region10: #{_lambda_.5} parent=5 // pred_check_branch
      %143 = sbr.rel (%p140) target = $region12
    $region11: #{_lambda_.5} parent=5 // pred_region
      %s144 = ssub.s32 %s10, 1
      // Predicated region
      $region13: #{_lambda_.5} parent=11 // pred_check
        %p145 = pneg %p83
      $region14: #{_lambda_.5} parent=11 // pred_check_branch
        %147 = sbr.rel (%p145) target = $region16
      $region15: #{_lambda_.5} parent=11 // pred_region
        _
      $region16: #{_lambda_.5} parent=11 // pred_fallthru
        _
      // Predicated region
      $region17: #{_lambda_.5} parent=11 // pred_check
        %p148 = pneg %p104
      $region18: #{_lambda_.5} parent=11 // pred_check_branch
        %150 = sbr.rel (%p148) target = $region20
      $region19: #{_lambda_.5} parent=11 // pred_region
        _
      $region20: #{_lambda_.5} parent=11 // pred_fallthru
        _
    $region12: #{_lambda_.5} parent=5 // pred_fallthru
      _
    %p151 = scmp.lt.s32.totalorder %s10, 4
    // Predicated region
    $region21: #{_lambda_.5} parent=5 // pred_check
      %p152 = pneg %p151
    $region22: #{_lambda_.5} parent=5 // pred_check_branch
      %154 = sbr.rel (%p152) target = $region24
    $region23: #{_lambda_.5} parent=5 // pred_region
      // Predicated region
      $region25: #{_lambda_.5} parent=23 // pred_check
        %p155 = pneg %p30
      $region26: #{_lambda_.5} parent=23 // pred_check_branch
        %157 = sbr.rel (%p155) target = $region28
      $region27: #{_lambda_.5} parent=23 // pred_region
        %p158 = scmp.lt.s32.totalorder %s10, 3
        %s159 = scalar_select %p158, %s10, 3
        %s160 = smul.addr %s159, 8
        %s161 = scalar_lea.vmem %s0, %s160
      $region28: #{_lambda_.5} parent=23 // pred_fallthru
        _
      // Predicated region
      $region29: #{_lambda_.5} parent=23 // pred_check
        %p162 = pneg %p56
      $region30: #{_lambda_.5} parent=23 // pred_check_branch
        %164 = sbr.rel (%p162) target = $region32
      $region31: #{_lambda_.5} parent=23 // pred_region
        %p165 = scmp.lt.s32.totalorder %s10, 3
        %s166 = scalar_select %p165, %s10, 3
        %s167 = smul.addr %s166, 8
        %s168 = scalar_lea.vmem %s1, %s167
      $region32: #{_lambda_.5} parent=23 // pred_fallthru
        _
    $region24: #{_lambda_.5} parent=5 // pred_fallthru
      _
    %p169 = scmp.le.s32.totalorder 1, %s10
    %p170 = scmp.lt.s32.totalorder %s10, 5
    %p171 = pnand %p169, %p170
    %p172 = pneg %p171
    // Predicated region
    $region33: #{_lambda_.5} parent=5 // pred_check
      _
    $region34: #{_lambda_.5} parent=5 // pred_check_branch
      %174 = sbr.rel (%p171) target = $region36
    $region35: #{_lambda_.5} parent=5 // pred_region
      %s175 = ssub.s32 %s10, 1
      %p176 = scmp.lt.s32.totalorder %s15, 3
      %s177 = scalar_select %p176, %s15, 3
      %s178 = smul.addr %s177, 8
      %s179 = scalar_lea.vmem %s0, %s178
      %p180 = pneg %p36
      %p181 = pneg %p33
      %p182 = scmp.lt.s32.totalorder %s15, 3
      %s183 = scalar_select %p182, %s15, 3
      %s184 = smul.addr %s183, 8
      %s185 = scalar_lea.vmem %s1, %s184
      %p186 = pneg %p62
      %p187 = pneg %p59
      %p188 = pneg %p83
      %p189 = pneg %p80
      %p190 = pneg %p104
      %p191 = pneg %p101
      %p192 = pneg %p130
      %p193 = pneg %p127
      %p194 = scmp.lt.s32.totalorder %s15, 3
      %s195 = scalar_select %p194, %s15, 3
      %s196 = smul.addr %s195, 8
      %s197 = scalar_lea.vmem %s4, %s196
      %p198 = scmp.lt.s32.totalorder %s15, 3
      %s199 = scalar_select %p198, %s15, 3
      %s200 = smul.addr %s199, 8
      %s201 = scalar_lea.vmem %s0, %s200
      %p202 = scmp.lt.s32.totalorder %s15, 3
      %s203 = scalar_select %p202, %s15, 3
      %s204 = smul.addr %s203, 8
      %s205 = scalar_lea.vmem %s1, %s204
      %p206 = scmp.lt.s32.totalorder %s15, 3
      %s207 = scalar_select %p206, %s15, 3
      %s208 = smul.addr %s207, 8
      %s209 = scalar_lea.vmem %s4, %s208
      %v210 = vld [vmem:[%s201] sm:$0xff]
      %v211 = vld [vmem:[%s2] sm:$0x1]
      %v213 = vlaneseq
      %v214 = vshrl.u32 %v213, 7
      %v215 = vsub.s32 0, %v214
      %v216 = vrot.slane %v211, %v215
      %v218 = vmul.f32 %v210, %v216
      %v219 = vld [vmem:[%s3] sm:$0x1]
      %v221 = vlaneseq
      %v222 = vshrl.u32 %v221, 7
      %v223 = vsub.s32 0, %v222
      %v224 = vrot.slane %v219, %v223
      %v226 = vadd.f32 %v218, %v224
      %v227 = vmul.f32 %v226, 0.1
      %v228 = vld [vmem:[%s205] sm:$0xff]
      %v229 = vadd.f32 %v227, %v228
      %230 = vst [vmem:[%s209] sm:$0xff] %v229
      %p231 = scmp.lt.s32.totalorder %s15, 3
      %s232 = scalar_select %p231, %s15, 3
      %s233 = smul.addr %s232, 8
      %s234 = scalar_lea.vmem %s4, %s233
      // Predicated region
      $region37: #{_lambda_.5} parent=35 // pred_check
        %p235 = pneg %p127
      $region38: #{_lambda_.5} parent=35 // pred_check_branch
        %237 = sbr.rel (%p235) target = $region40
      $region39: #{_lambda_.5} parent=35 // pred_region
        _
      $region40: #{_lambda_.5} parent=35 // pred_fallthru
        _
    $region36: #{_lambda_.5} parent=5 // pred_fallthru
      _
    %p238 = scmp.le.s32.totalorder 2, %s10
    // Predicated region
    $region41: #{_lambda_.5} parent=5 // pred_check
      %p239 = pneg %p238
    $region42: #{_lambda_.5} parent=5 // pred_check_branch
      %241 = sbr.rel (%p239) target = $region44
    $region43: #{_lambda_.5} parent=5 // pred_region
      %s242 = ssub.s32 %s10, 2
      // Predicated region
      $region45: #{_lambda_.5} parent=43 // pred_check
        %p243 = pneg %p133
      $region46: #{_lambda_.5} parent=43 // pred_check_branch
        %245 = sbr.rel (%p243) target = $region48
      $region47: #{_lambda_.5} parent=43 // pred_region
        %p246 = scmp.lt.s32.totalorder %s16, 3
        %s247 = scalar_select %p246, %s16, 3
        %s248 = smul.addr %s247, 8
        %s249 = scalar_lea.vmem %s4, %s248
      $region48: #{_lambda_.5} parent=43 // pred_fallthru
        _
    $region44: #{_lambda_.5} parent=5 // pred_fallthru
      _
  $region6: #{_lambda_.5} parent=0 // loop_footer
    %s14 = sadd.s32 1, %s10
  $region7: #{_lambda_.5} parent=0 // loop_footer_branch
    %9 = sbr.rel target = $region3
  $region8: #{_lambda_.5} parent=0 // loop_exit
    _

</llo_original>
